<compile_context>
chip_gen: v5e
topology: v5e:2x2
jax: 0.10.0
libtpu: 0.0.40
codegen_flags: <defaults>
</compile_context>

<pallas_src>
import math

import numpy as np
import jax
import jax.numpy as jnp
from jax import lax
from jax.experimental import pallas as pl
from jax.experimental.pallas import tpu as pltpu

# ----- module-consistent config -----
BATCH = 2
SEQ = 8
DIM = 64                          # d_model
N_HEADS = 4
N_KV_HEADS = 2
HEAD_DIM = DIM // N_HEADS         # 16
HALF = HEAD_DIM // 2              # 8
N_REP = N_HEADS // N_KV_HEADS     # 2
HIDDEN = 128                      # ffn hidden_dim
EPS = 1e-5
SCALE = 1.0 / math.sqrt(HEAD_DIM)

TOKENS = BATCH * SEQ              # 16 (flattened batch*seq)
N_ALL = N_HEADS + N_KV_HEADS      # 6 (q heads + kv heads)
QK_HALF = N_ALL * HALF            # 48 (width of the "real" / "imag" column groups)
Q_ROWS = N_HEADS * TOKENS         # 64 (head-folded q rows)
KV_ROWS = N_KV_HEADS * TOKENS     # 32 (head-folded kv rows)
NEG_INF = -1e30


def transformer_block_kernel(xcs_ref, mask_ref, wqkv_ref, wo_ref, w13_ref,
                             w2_ref, o_ref):
    """Whole transformer block, all tokens resident in VMEM (grid=())."""
    bf16 = jnp.bfloat16

    x = xcs_ref[0:TOKENS, :]                               # (16, 64) f32
    cos = xcs_ref[TOKENS:2 * TOKENS, 0:QK_HALF]            # (16, 48) f32
    sin = xcs_ref[2 * TOKENS:3 * TOKENS, 0:QK_HALF]        # (16, 48) f32

    # ---------------- attention ----------------
    # RMSNorm (gain folded into wqkv rows host-side)
    xn = x * lax.rsqrt(jnp.mean(x * x, axis=-1, keepdims=True) + EPS)

    # fused QKV projection; columns = [q_r | k_r | q_i | k_i | v]
    qkv = jnp.dot(xn.astype(bf16), wqkv_ref[...],
                  preferred_element_type=jnp.float32)      # (16, 128)

    qk_r = qkv[:, :QK_HALF]                                # (16, 48)
    qk_i = qkv[:, QK_HALF:2 * QK_HALF]                     # (16, 48)
    v = qkv[:, 2 * QK_HALF:]                               # (16, 32)

    # vectorized RoPE on the de-interleaved layout (f32, full-width FMAs)
    rot_r = qk_r * cos - qk_i * sin
    rot_i = qk_r * sin + qk_i * cos

    # fold heads into the row axis: (T, 6, 8)x2 -> (6*T, 16), rows head-major,
    # per-row head_dim layout = [reals | imags] (q.k invariant to this perm)
    qk = jnp.concatenate([rot_r.reshape(TOKENS, N_ALL, HALF),
                          rot_i.reshape(TOKENS, N_ALL, HALF)], axis=-1)
    qk = qk.transpose(1, 0, 2).reshape(N_ALL * TOKENS, HEAD_DIM).astype(bf16)
    qh = qk[:Q_ROWS]                                       # (64, 16)
    kh = qk[Q_ROWS:]                                       # (32, 16)
    vh = v.reshape(TOKENS, N_KV_HEADS, HEAD_DIM).transpose(1, 0, 2) \
          .reshape(KV_ROWS, HEAD_DIM).astype(bf16)         # (32, 16)

    # scores as one plain 2-D matmul; GQA routing + causal + batch-block are
    # all inside the precomputed additive mask (no KV repeat, no iota/select).
    s = jnp.einsum('qd,kd->qk', qh, kh,
                   preferred_element_type=jnp.float32)     # (64, 32)
    s = s + mask_ref[...]
    s = s - jnp.max(s, axis=-1, keepdims=True)
    p = jnp.exp(s)
    p = p * pl.reciprocal(jnp.sum(p, axis=-1, keepdims=True), approx=True)

    o = jnp.dot(p.astype(bf16), vh,
                preferred_element_type=jnp.float32)        # (64, 16)
    attn = o.reshape(N_HEADS, TOKENS, HEAD_DIM).transpose(1, 0, 2) \
            .reshape(TOKENS, DIM)                          # (16, 64)
    attn = jnp.dot(attn.astype(bf16), wo_ref[...],
                   preferred_element_type=jnp.float32)

    # TODO(synk): nn.Dropout (attn/resid/ffn) is identity in eval / p=0; omitted.
    h1 = x + attn

    # ---------------- feed-forward (SwiGLU), fused w1|w3 ----------------
    hn = h1 * lax.rsqrt(jnp.mean(h1 * h1, axis=-1, keepdims=True) + EPS)
    g13 = jnp.dot(hn.astype(bf16), w13_ref[...],
                  preferred_element_type=jnp.float32)      # (16, 256)
    g1 = g13[:, :HIDDEN]
    g3 = g13[:, HIDDEN:]
    silu = g1 * pl.reciprocal(1.0 + jnp.exp(-g1), approx=True)
    ffn = jnp.dot((silu * g3).astype(bf16), w2_ref[...],
                  preferred_element_type=jnp.float32)

    o_ref[...] = h1 + ffn


def transformer_block(xcs, mask, wqkv, wo, w13, w2):
    # Single program (grid=()): all 16 tokens + ~72 KB of bf16 weights fit in
    # VMEM with huge margin (even on v7x's 64 MiB).
    # TODO(synk): for real workloads, grid over >=128-token tiles marked
    # "parallel" (shards across v7x's 2 TensorCores) and/or loop layers inside
    # one pallas_call with stacked (L,...) weights to amortize launch overhead.
    vmem = pl.BlockSpec(memory_space=pltpu.MemorySpace.VMEM)
    out = pl.pallas_call(
        transformer_block_kernel,
        out_shape=jax.ShapeDtypeStruct((TOKENS, DIM), jnp.float32),
        in_specs=[vmem] * 6,
        out_specs=vmem,
    )(xcs, mask, wqkv, wo, w13, w2)
    return out.reshape(BATCH, SEQ, DIM)


# ----------------- host-side packing helpers -----------------
def _ri_col_index(n_heads):
    """Per-head interleaved (r0,i0,r1,i1,...) -> [all reals], [all imags]."""
    r = np.asarray([h * HEAD_DIM + 2 * m for h in range(n_heads) for m in range(HALF)])
    return r, r + 1


def pack_weights(wq, wk, wv, wo, w1, w2, w3, attn_gain, ffn_gain):
    """Fold RMSNorm gains + 1/sqrt(head_dim) into the projections and pack:
       wqkv columns = [q_r | k_r | q_i | k_i | v], w13 columns = [w1 | w3]."""
    qr, qi = _ri_col_index(N_HEADS)
    kr, ki = _ri_col_index(N_KV_HEADS)
    wq_f = (attn_gain[:, None] * wq) * SCALE
    wk_f = attn_gain[:, None] * wk
    wv_f = attn_gain[:, None] * wv
    wqkv = jnp.concatenate([wq_f[:, qr], wk_f[:, kr],
                            wq_f[:, qi], wk_f[:, ki], wv_f], axis=1)   # (64,128)
    w13 = jnp.concatenate([ffn_gain[:, None] * w1,
                           ffn_gain[:, None] * w3], axis=1)            # (64,256)
    return (wqkv.astype(jnp.bfloat16), wo.astype(jnp.bfloat16),
            w13.astype(jnp.bfloat16), w2.astype(jnp.bfloat16))


def build_mask():
    """Additive f32 mask (Q_ROWS, KV_ROWS): 0 where q-row may attend, -1e30 else.
    Row = (head, batch*seq token); col = (kv head, batch*seq token)."""
    r = np.arange(Q_ROWS)
    c = np.arange(KV_ROWS)
    h, tq = r // TOKENS, r % TOKENS
    g, tk = c // TOKENS, c % TOKENS
    bq, sq = tq // SEQ, tq % SEQ
    bk, sk = tk // SEQ, tk % SEQ
    keep = ((g[None, :] == (h[:, None] // N_REP))
            & (bk[None, :] == bq[:, None])
            & (sk[None, :] <= sq[:, None]))
    return jnp.asarray(np.where(keep, 0.0, NEG_INF), dtype=jnp.float32)


def precompute_freqs(head_dim, seq_len, theta=10000.0):
    inv = 1.0 / (theta ** (jnp.arange(0, head_dim, 2, dtype=jnp.float32) / head_dim))
    t = jnp.arange(seq_len, dtype=jnp.float32)
    freqs = jnp.outer(t, inv)                 # (S, head_dim//2)
    return jnp.cos(freqs), jnp.sin(freqs)


def pack_activations(x, cos, sin):
    """One (3*TOKENS, DIM) f32 slab: rows [x | cos (padded) | sin (padded)]."""
    x2 = x.reshape(TOKENS, DIM)
    cos48 = jnp.tile(cos, (BATCH, N_ALL))     # (16, 48)
    sin48 = jnp.tile(sin, (BATCH, N_ALL))
    pad = DIM - QK_HALF
    cos_p = jnp.pad(cos48, ((0, 0), (0, pad)))
    sin_p = jnp.pad(sin48, ((0, 0), (0, pad)))
    return jnp.concatenate([x2, cos_p, sin_p], axis=0)


# ----------------- pure-JAX reference (mirrors the torch module) -----------------
def reference_block(x, cos, sin, wq, wk, wv, wo, w1, w2, w3, anw, fnw):
    B, S, D = x.shape

    def rms(v, w):
        ms = jnp.mean(v * v, axis=-1, keepdims=True)
        return v * lax.rsqrt(ms + EPS) * w

    def rope(t):
        tr, ti = t[..., 0::2], t[..., 1::2]
        c = cos[None, :, None, :]
        s = sin[None, :, None, :]
        out_r = tr * c - ti * s
        out_i = tr * s + ti * c
        return jnp.stack([out_r, out_i], axis=-1).reshape(t.shape)

    xn = rms(x, anw)
    q = (xn @ wq).reshape(B, S, N_HEADS, HEAD_DIM)
    k = (xn @ wk).reshape(B, S, N_KV_HEADS, HEAD_DIM)
    v = (xn @ wv).reshape(B, S, N_KV_HEADS, HEAD_DIM)
    q, k = rope(q), rope(k)
    k = jnp.repeat(k, N_REP, axis=2)
    v = jnp.repeat(v, N_REP, axis=2)
    q, k, v = (t.transpose(0, 2, 1, 3) for t in (q, k, v))
    scores = jnp.einsum('bhqd,bhkd->bhqk', q, k) * SCALE
    causal = jnp.tril(jnp.ones((S, S), dtype=bool))
    scores = jnp.where(causal[None, None], scores, -jnp.inf)
    p = jax.nn.softmax(scores, axis=-1)
    o = jnp.einsum('bhqk,bhkd->bhqd', p, v)
    attn = o.transpose(0, 2, 1, 3).reshape(B, S, D) @ wo
    h = x + attn
    hn = rms(h, fnw)
    ffn = (jax.nn.silu(hn @ w1) * (hn @ w3)) @ w2
    return h + ffn


if __name__ == "__main__":
    key = jax.random.PRNGKey(0)
    ks = jax.random.split(key, 8)

    x = jax.random.normal(ks[0], (BATCH, SEQ, DIM), dtype=jnp.float32)

    init = lambda k, shp: (0.02 * jax.random.normal(k, shp)).astype(jnp.float32)
    wq = init(ks[1], (DIM, N_HEADS * HEAD_DIM))
    wk = init(ks[2], (DIM, N_KV_HEADS * HEAD_DIM))
    wv = init(ks[3], (DIM, N_KV_HEADS * HEAD_DIM))
    wo = init(ks[4], (N_HEADS * HEAD_DIM, DIM))
    w1 = init(ks[5], (DIM, HIDDEN))
    w2 = init(ks[6], (HIDDEN, DIM))
    w3 = init(ks[7], (DIM, HIDDEN))
    anw = jnp.ones((DIM,), jnp.float32)       # attention_norm.weight
    fnw = jnp.ones((DIM,), jnp.float32)       # ffn_norm.weight

    cos, sin = precompute_freqs(HEAD_DIM, SEQ)

    # bf16-rounded weights (kernel stores bf16; reference uses the same values)
    rnd = lambda w: w.astype(jnp.bfloat16).astype(jnp.float32)
    wq_r, wk_r, wv_r, wo_r = rnd(wq), rnd(wk), rnd(wv), rnd(wo)
    w1_r, w2_r, w3_r = rnd(w1), rnd(w2), rnd(w3)

    # kernel-side packing (gains + scale folded, RoPE de-interleave, fused slabs)
    wqkv_b, wo_b, w13_b, w2_b = pack_weights(wq_r, wk_r, wv_r, wo_r,
                                             w1_r, w2_r, w3_r, anw, fnw)
    xcs = pack_activations(x, cos, sin)       # (48, 64) f32
    mask = build_mask()                       # (64, 32) f32 additive

    out = transformer_block(xcs, mask, wqkv_b, wo_b, w13_b, w2_b)
    jax.block_until_ready(out)

    assert out.shape == (BATCH, SEQ, DIM)
    assert bool(jnp.all(jnp.isfinite(out)))

    ref = reference_block(x, cos, sin, wq_r, wk_r, wv_r, wo_r,
                          w1_r, w2_r, w3_r, anw, fnw)
    err = float(jnp.max(jnp.abs(out - ref)))
    assert err < 2e-2, f"mismatch vs reference: max abs err = {err}"
    print("KERNEL_OK")
</pallas_src>

<mosaic_0001>
module attributes {stable_mosaic.version = 11 : i64} {
  func.func @transformer_block_kernel(%arg0: memref<48x64xf32, #tpu.memory_space<vmem>>, %arg1: memref<64x32xf32, #tpu.memory_space<vmem>>, %arg2: memref<64x128xbf16, #tpu.memory_space<vmem>>, %arg3: memref<64x64xbf16, #tpu.memory_space<vmem>>, %arg4: memref<64x256xbf16, #tpu.memory_space<vmem>>, %arg5: memref<128x64xbf16, #tpu.memory_space<vmem>>, %arg6: memref<16x64xf32, #tpu.memory_space<vmem>>) attributes {dimension_semantics = [], scalar_prefetch = 0 : i64, scratch_operands = 0 : i64, tpu.core_type = #tpu.core_type<tc>} {
    %c0 = arith.constant 0 : index
    %c0_0 = arith.constant 0 : index
    %0 = vector.load %arg0[%c0, %c0_0] : memref<48x64xf32, #tpu.memory_space<vmem>>, vector<16x64xf32>
    %c16 = arith.constant 16 : index
    %c0_1 = arith.constant 0 : index
    %1 = vector.load %arg0[%c16, %c0_1] : memref<48x64xf32, #tpu.memory_space<vmem>>, vector<16x48xf32>
    %c32 = arith.constant 32 : index
    %c0_2 = arith.constant 0 : index
    %2 = vector.load %arg0[%c32, %c0_2] : memref<48x64xf32, #tpu.memory_space<vmem>>, vector<16x48xf32>
    %3 = arith.mulf %0, %0 : vector<16x64xf32>
    %cst = arith.constant dense<0.000000e+00> : vector<16xf32>
    %4 = vector.multi_reduction <add>, %3, %cst [1] : vector<16x64xf32> to vector<16xf32>
    %5 = vector.shape_cast %4 : vector<16xf32> to vector<16x1xf32>
    %cst_3 = arith.constant 6.400000e+01 : f32
    %6 = vector.broadcast %cst_3 : f32 to vector<16x1xf32>
    %7 = arith.divf %5, %6 : vector<16x1xf32>
    %cst_4 = arith.constant 9.99999974E-6 : f32
    %8 = vector.broadcast %cst_4 : f32 to vector<16x1xf32>
    %9 = arith.addf %7, %8 : vector<16x1xf32>
    %10 = math.rsqrt %9 : vector<16x1xf32>
    %11 = vector.broadcast %10 : vector<16x1xf32> to vector<16x64xf32>
    %12 = arith.mulf %0, %11 : vector<16x64xf32>
    %13 = arith.truncf %12 : vector<16x64xf32> to vector<16x64xbf16>
    %c0_5 = arith.constant 0 : index
    %c0_6 = arith.constant 0 : index
    %14 = vector.load %arg2[%c0_5, %c0_6] : memref<64x128xbf16, #tpu.memory_space<vmem>>, vector<64x128xbf16>
    %cst_7 = arith.constant dense<0.000000e+00> : vector<16x128xf32>
    %15 = tpu.matmul %13, %14, %cst_7 {dimension_numbers = #tpu.dot_dimension_numbers<[1], [0], [0], [1], [0, 0, 1, 1], [], []>} : vector<16x64xbf16>, vector<64x128xbf16>, vector<16x128xf32> -> vector<16x128xf32>
    %16 = vector.extract_strided_slice %15 {offsets = [0, 0], sizes = [16, 48], strides = [1, 1]} : vector<16x128xf32> to vector<16x48xf32>
    %17 = vector.extract_strided_slice %15 {offsets = [0, 48], sizes = [16, 48], strides = [1, 1]} : vector<16x128xf32> to vector<16x48xf32>
    %18 = vector.extract_strided_slice %15 {offsets = [0, 96], sizes = [16, 32], strides = [1, 1]} : vector<16x128xf32> to vector<16x32xf32>
    %19 = arith.mulf %16, %1 : vector<16x48xf32>
    %20 = arith.mulf %17, %2 : vector<16x48xf32>
    %21 = arith.subf %19, %20 : vector<16x48xf32>
    %22 = arith.mulf %16, %2 : vector<16x48xf32>
    %23 = arith.mulf %17, %1 : vector<16x48xf32>
    %24 = arith.addf %22, %23 : vector<16x48xf32>
    %25 = vector.shape_cast %21 : vector<16x48xf32> to vector<16x6x8xf32>
    %26 = vector.shape_cast %24 : vector<16x48xf32> to vector<16x6x8xf32>
    %27 = tpu.concatenate %25, %26 in 2 : vector<16x6x8xf32>, vector<16x6x8xf32> -> vector<16x6x16xf32>
    %28 = tpu.transpose %27, [1, 0, 2] : vector<16x6x16xf32> -> vector<6x16x16xf32>
    %29 = vector.shape_cast %28 : vector<6x16x16xf32> to vector<96x16xf32>
    %30 = arith.truncf %29 : vector<96x16xf32> to vector<96x16xbf16>
    %31 = vector.extract_strided_slice %30 {offsets = [0, 0], sizes = [64, 16], strides = [1, 1]} : vector<96x16xbf16> to vector<64x16xbf16>
    %32 = vector.extract_strided_slice %30 {offsets = [64, 0], sizes = [32, 16], strides = [1, 1]} : vector<96x16xbf16> to vector<32x16xbf16>
    %33 = vector.shape_cast %18 : vector<16x32xf32> to vector<16x2x16xf32>
    %34 = tpu.transpose %33, [1, 0, 2] : vector<16x2x16xf32> -> vector<2x16x16xf32>
    %35 = vector.shape_cast %34 : vector<2x16x16xf32> to vector<32x16xf32>
    %36 = arith.truncf %35 : vector<32x16xf32> to vector<32x16xbf16>
    "tpu.trace_start"() <{level = 10 : i32, message = "qd,kd->qk"}> : () -> ()
    %cst_8 = arith.constant dense<0.000000e+00> : vector<64x32xf32>
    %37 = tpu.matmul %31, %32, %cst_8 {dimension_numbers = #tpu.dot_dimension_numbers<[1], [1], [0], [0], [0, 0, 1, 0], [], []>} : vector<64x16xbf16>, vector<32x16xbf16>, vector<64x32xf32> -> vector<64x32xf32>
    "tpu.trace_stop"() : () -> ()
    %c0_9 = arith.constant 0 : index
    %c0_10 = arith.constant 0 : index
    %38 = vector.load %arg1[%c0_9, %c0_10] : memref<64x32xf32, #tpu.memory_space<vmem>>, vector<64x32xf32>
    %39 = arith.addf %37, %38 : vector<64x32xf32>
    %cst_11 = arith.constant dense<0xFF800000> : vector<64xf32>
    %40 = vector.multi_reduction <maximumf>, %39, %cst_11 [1] : vector<64x32xf32> to vector<64xf32>
    %41 = vector.shape_cast %40 : vector<64xf32> to vector<64x1xf32>
    %42 = vector.broadcast %41 : vector<64x1xf32> to vector<64x32xf32>
    %43 = arith.subf %39, %42 : vector<64x32xf32>
    %44 = math.exp %43 : vector<64x32xf32>
    %cst_12 = arith.constant dense<0.000000e+00> : vector<64xf32>
    %45 = vector.multi_reduction <add>, %44, %cst_12 [1] : vector<64x32xf32> to vector<64xf32>
    %46 = vector.shape_cast %45 : vector<64xf32> to vector<64x1xf32>
    %47 = tpu.reciprocal %46 {approx = true} : vector<64x1xf32> -> vector<64x1xf32>
    %48 = vector.broadcast %47 : vector<64x1xf32> to vector<64x32xf32>
    %49 = arith.mulf %44, %48 : vector<64x32xf32>
    %50 = arith.truncf %49 : vector<64x32xf32> to vector<64x32xbf16>
    %cst_13 = arith.constant dense<0.000000e+00> : vector<64x16xf32>
    %51 = tpu.matmul %50, %36, %cst_13 {dimension_numbers = #tpu.dot_dimension_numbers<[1], [0], [0], [1], [0, 0, 1, 1], [], []>} : vector<64x32xbf16>, vector<32x16xbf16>, vector<64x16xf32> -> vector<64x16xf32>
    %52 = vector.shape_cast %51 : vector<64x16xf32> to vector<4x16x16xf32>
    %53 = tpu.transpose %52, [1, 0, 2] : vector<4x16x16xf32> -> vector<16x4x16xf32>
    %54 = vector.shape_cast %53 : vector<16x4x16xf32> to vector<16x64xf32>
    %55 = arith.truncf %54 : vector<16x64xf32> to vector<16x64xbf16>
    %c0_14 = arith.constant 0 : index
    %c0_15 = arith.constant 0 : index
    %56 = vector.load %arg3[%c0_14, %c0_15] : memref<64x64xbf16, #tpu.memory_space<vmem>>, vector<64x64xbf16>
    %cst_16 = arith.constant dense<0.000000e+00> : vector<16x64xf32>
    %57 = tpu.matmul %55, %56, %cst_16 {dimension_numbers = #tpu.dot_dimension_numbers<[1], [0], [0], [1], [0, 0, 1, 1], [], []>} : vector<16x64xbf16>, vector<64x64xbf16>, vector<16x64xf32> -> vector<16x64xf32>
    %58 = arith.addf %0, %57 : vector<16x64xf32>
    %59 = arith.mulf %58, %58 : vector<16x64xf32>
    %cst_17 = arith.constant dense<0.000000e+00> : vector<16xf32>
    %60 = vector.multi_reduction <add>, %59, %cst_17 [1] : vector<16x64xf32> to vector<16xf32>
    %61 = vector.shape_cast %60 : vector<16xf32> to vector<16x1xf32>
    %cst_18 = arith.constant 6.400000e+01 : f32
    %62 = vector.broadcast %cst_18 : f32 to vector<16x1xf32>
    %63 = arith.divf %61, %62 : vector<16x1xf32>
    %cst_19 = arith.constant 9.99999974E-6 : f32
    %64 = vector.broadcast %cst_19 : f32 to vector<16x1xf32>
    %65 = arith.addf %63, %64 : vector<16x1xf32>
    %66 = math.rsqrt %65 : vector<16x1xf32>
    %67 = vector.broadcast %66 : vector<16x1xf32> to vector<16x64xf32>
    %68 = arith.mulf %58, %67 : vector<16x64xf32>
    %69 = arith.truncf %68 : vector<16x64xf32> to vector<16x64xbf16>
    %c0_20 = arith.constant 0 : index
    %c0_21 = arith.constant 0 : index
    %70 = vector.load %arg4[%c0_20, %c0_21] : memref<64x256xbf16, #tpu.memory_space<vmem>>, vector<64x256xbf16>
    %cst_22 = arith.constant dense<0.000000e+00> : vector<16x256xf32>
    %71 = tpu.matmul %69, %70, %cst_22 {dimension_numbers = #tpu.dot_dimension_numbers<[1], [0], [0], [1], [0, 0, 1, 1], [], []>} : vector<16x64xbf16>, vector<64x256xbf16>, vector<16x256xf32> -> vector<16x256xf32>
    %72 = vector.extract_strided_slice %71 {offsets = [0, 0], sizes = [16, 128], strides = [1, 1]} : vector<16x256xf32> to vector<16x128xf32>
    %73 = vector.extract_strided_slice %71 {offsets = [0, 128], sizes = [16, 128], strides = [1, 1]} : vector<16x256xf32> to vector<16x128xf32>
    %cst_23 = arith.constant 0.000000e+00 : f32
    %74 = vector.broadcast %cst_23 : f32 to vector<16x128xf32>
    %75 = arith.subf %74, %72 : vector<16x128xf32>
    %76 = math.exp %75 : vector<16x128xf32>
    %cst_24 = arith.constant 1.000000e+00 : f32
    %77 = vector.broadcast %cst_24 : f32 to vector<16x128xf32>
    %78 = arith.addf %77, %76 : vector<16x128xf32>
    %79 = tpu.reciprocal %78 {approx = true} : vector<16x128xf32> -> vector<16x128xf32>
    %80 = arith.mulf %72, %79 : vector<16x128xf32>
    %81 = arith.mulf %80, %73 : vector<16x128xf32>
    %82 = arith.truncf %81 : vector<16x128xf32> to vector<16x128xbf16>
    %c0_25 = arith.constant 0 : index
    %c0_26 = arith.constant 0 : index
    %83 = vector.load %arg5[%c0_25, %c0_26] : memref<128x64xbf16, #tpu.memory_space<vmem>>, vector<128x64xbf16>
    %cst_27 = arith.constant dense<0.000000e+00> : vector<16x64xf32>
    %84 = tpu.matmul %82, %83, %cst_27 {dimension_numbers = #tpu.dot_dimension_numbers<[1], [0], [0], [1], [0, 0, 1, 1], [], []>} : vector<16x128xbf16>, vector<128x64xbf16>, vector<16x64xf32> -> vector<16x64xf32>
    %85 = arith.addf %58, %84 : vector<16x64xf32>
    %c0_28 = arith.constant 0 : index
    %c0_29 = arith.constant 0 : index
    %86 = vector.load %arg6[%c0_28, %c0_29] : memref<16x64xf32, #tpu.memory_space<vmem>>, vector<16x64xf32>
    tpu.vector_store %arg6[%c0_28, %c0_29], %85 {strides = array<i32>} : memref<16x64xf32, #tpu.memory_space<vmem>>, vector<16x64xf32>,
    return
  }
}

</mosaic_0001>

<llo_original>
// kernel: tpu_custom_call.1
$region0: #{tpu_custom_call.1}
  #allocation0 [shape = 'u32[]', space=smem, size = 0x4, offset = 0x4, fixed_abs, tag = 'smem constant byte address 0x4 - core index']
  #allocation1 [shape = 'u32[72,128]{1,0:T(1,128)}', space=vmem, size = 0x9000, scoped, tag = 'internal scratch']
  %s0 = inlined_call_operand.vmem [shape: f32[48,64], index: 0, kind: input, shape index: {}]
  %s1 = inlined_call_operand.vmem [shape: f32[64,32], index: 1, kind: input, shape index: {}]
  %s2 = inlined_call_operand.vmem [shape: bf16[64,128], index: 2, kind: input, shape index: {}]
  %s3 = inlined_call_operand.hbm [shape: bf16[64,64], index: 3, kind: input, shape index: {}]
  %s4 = inlined_call_operand.vmem [shape: bf16[64,256], index: 4, kind: input, shape index: {}]
  %s5 = inlined_call_operand.vmem [shape: bf16[128,64], index: 5, kind: input, shape index: {}]
  %s6 = inlined_call_operand.hbm [shape: f32[16,64], index: 6, kind: output, shape index: {}]
  %s7 = sld [smem:[#allocation0]]
  $region38: #{tpu_custom_call.1} parent=0
    _
  %s9 = ssub.s32 1, %s7
  %s10 = scalar_select 0, %s9, %s7
  $region1: #{tpu_custom_call.1} parent=0
    #allocation2 [shape = 'u8[16384]{0}', space=vmem, size = 0x4000, scoped, tag = 'input window, operand 3, single buffered']
    #allocation3 [shape = 's32[1]{0}', space=sflag, size = 0x4, scoped, tag = 'scoped memory for tpu_custom_call.1']
    #allocation4 [shape = 's32[1]{0}', space=sflag, size = 0x4, scoped, tag = 'scoped memory for tpu_custom_call.1']
    #allocation5 [shape = 'u8[8192]{0}', space=vmem, size = 0x2000, scoped, tag = 'output window, operand 0, single buffered']
    %11 = vsyncpa [#allocation3], 0
    %12 = vsyncpa [#allocation4], 0
    // Predicated region
    $region2: #{tpu_custom_call.1} parent=1 // pred_check
      _
    $region3: #{tpu_custom_call.1} parent=1 // pred_check_branch
      %14 = sbr.rel (0) target = $region5
    $region4: #{tpu_custom_call.1} parent=1 // pred_region
      _
    $region5: #{tpu_custom_call.1} parent=1 // pred_fallthru
      _
    // Predicated region
    $region6: #{tpu_custom_call.1} parent=1 // pred_check
      _
    $region7: #{tpu_custom_call.1} parent=1 // pred_check_branch
      %16 = sbr.rel (0) target = $region9
    $region8: #{tpu_custom_call.1} parent=1 // pred_region
      _
    $region9: #{tpu_custom_call.1} parent=1 // pred_fallthru
      _
    // Predicated region
    $region10: #{tpu_custom_call.1} parent=1 // pred_check
      _
    $region11: #{tpu_custom_call.1} parent=1 // pred_check_branch
      %18 = sbr.rel (0) target = $region13
    $region12: #{tpu_custom_call.1} parent=1 // pred_region
      _
    $region13: #{tpu_custom_call.1} parent=1 // pred_fallthru
      _
    // Predicated region
    $region14: #{tpu_custom_call.1} parent=1 // pred_check
      _
    $region15: #{tpu_custom_call.1} parent=1 // pred_check_branch
      %20 = sbr.rel (0) target = $region17
    $region16: #{tpu_custom_call.1} parent=1 // pred_region
      %22 = vsyncadd [#allocation3], 0
      %s23 = sshll.u32 %s3, 4
      %s24 = int_to_ptr.hbm [resolvable:$true] %s23
      %s25 = sshll.u32 [#allocation2], 4
      %s26 = int_to_ptr.vmem [resolvable:$true] %s25
      %31 = dma.hbm_to_vmem [thread:$0]  %s24, 512, %s26, [#allocation3], 64, 64, 4
    $region17: #{tpu_custom_call.1} parent=1 // pred_fallthru
      _
    // Predicated region
    $region18: #{tpu_custom_call.1} parent=1 // pred_check
      _
    $region19: #{tpu_custom_call.1} parent=1 // pred_check_branch
      %33 = sbr.rel (0) target = $region21
    $region20: #{tpu_custom_call.1} parent=1 // pred_region
      _
    $region21: #{tpu_custom_call.1} parent=1 // pred_fallthru
      _
    // Predicated region
    $region22: #{tpu_custom_call.1} parent=1 // pred_check
      _
    $region23: #{tpu_custom_call.1} parent=1 // pred_check_branch
      %35 = sbr.rel (0) target = $region25
    $region24: #{tpu_custom_call.1} parent=1 // pred_region
      _
    $region25: #{tpu_custom_call.1} parent=1 // pred_fallthru
      _
    // Predicated region
    $region26: #{tpu_custom_call.1} parent=1 // pred_check
      _
    $region27: #{tpu_custom_call.1} parent=1 // pred_check_branch
      %37 = sbr.rel (0) target = $region29
    $region28: #{tpu_custom_call.1} parent=1 // pred_region
      %39 = dma.done [#allocation3], 512
    $region29: #{tpu_custom_call.1} parent=1 // pred_fallthru
      _
    %v41 = vld [vmem:[%s0] sm:$0xff]
    %v42 = vld [vmem:[%s0 + $0x8] sm:$0xff]
    %v43 = vld [vmem:[%s0 + $0x10] sm:$0xff]
    %v44 = vld [vmem:[%s0 + $0x18] sm:$0xff]
    %v45 = vld [vmem:[%s0 + $0x20] sm:$0xff]
    %v46 = vld [vmem:[%s0 + $0x28] sm:$0xff]
    %v47 = vmul.f32 %v41, %v41
    %v48 = vmul.f32 %v42, %v42
    %vm49 = vcmask 523264
    %v50 = vsel %vm49, %v47, 0.0
    %51 = vadd.xlane.f32.xlu0 %v50
    %v52 = vpop.xlane.xlu0 %51
    %v53 = vsel %vm49, %v48, 0.0
    %54 = vadd.xlane.f32.xlu0 %v53
    %v55 = vpop.xlane.xlu0 %54
    %v56 = vrcp.pop 64.0
    %v57 = vmul.f32 64.0, %v56
    %v58 = vsub.f32 1.0, %v57
    %v59 = vmul.f32 %v56, %v58
    %v60 = vadd.f32 %v56, %v59
    %vm61 = vweird.f32 %v56
    %v62 = vsel %vm61, %v56, %v60
    %v63 = vmul.f32 %v52, %v62
    %v64 = vmul.f32 %v55, %v62
    %v65 = vadd.f32 %v63, 1e-05
    %v66 = vadd.f32 %v64, 1e-05
    %v67 = vrsqrt.pop %v65
    %v68 = vmul.f32 %v67, %v65
    %v69 = vmul.f32 %v68, %v67
    %v70 = vmul.f32 0.5, %v69
    %v71 = vsub.f32 1.5, %v70
    %v72 = vmul.f32 %v67, %v71
    %vm73 = vweird.f32 %v65
    %vm74 = vweird.f32 %v67
    %vm75 = vmor %vm73, %vm74
    %v76 = vsel %vm75, %v67, %v72
    %v77 = vrsqrt.pop %v66
    %v78 = vmul.f32 %v77, %v66
    %v79 = vmul.f32 %v78, %v77
    %v80 = vmul.f32 0.5, %v79
    %v81 = vsub.f32 1.5, %v80
    %v82 = vmul.f32 %v77, %v81
    %vm83 = vweird.f32 %v66
    %vm84 = vweird.f32 %v77
    %vm85 = vmor %vm83, %vm84
    %v86 = vsel %vm85, %v77, %v82
    %v87 = vmul.f32 %v41, %v76
    %v88 = vmul.f32 %v42, %v86
    %v89 = vpack.c.bf16 %v88, %v87
    %v90 = vld [vmem:[%s2] sm:$0xf]
    %v91 = vld [vmem:[%s2 + $0x4] sm:$0xf]
    %v92 = vld [vmem:[%s2 + $0x8] sm:$0xf]
    %v93 = vld [vmem:[%s2 + $0xc] sm:$0xf]
    %v94 = vld [vmem:[%s2 + $0x10] sm:$0xf]
    %v95 = vld [vmem:[%s2 + $0x14] sm:$0xf]
    %v96 = vld [vmem:[%s2 + $0x18] sm:$0xf]
    %v97 = vld [vmem:[%s2 + $0x1c] sm:$0xf]
    %v106 = vunpack.c.l.b16 %v90
    %v107 = vunpack.c.l.b16 %v91
    %v108 = vunpack.c.l.b16 %v92
    %v109 = vunpack.c.l.b16 %v93
    %v110 = vunpack.c.l.b16 %v94
    %v111 = vunpack.c.l.b16 %v95
    %v112 = vunpack.c.l.b16 %v96
    %v113 = vunpack.c.l.b16 %v97
    %v114 = vpack.c.b16 %v107, %v106
    %v115 = vpack.c.b16 %v109, %v108
    %v116 = vpack.c.b16 %v111, %v110
    %v117 = vpack.c.b16 %v113, %v112
    %v123 = vsel %vm49, %v89, 0
    %125 = vmatpush.bf16.msra.mxu0 0
    %126 = vmatpush.bf16.msra.mxu0 0
    %127 = vmatpush.bf16.msra.mxu0 0
    %128 = vmatpush.bf16.msra.mxu0 0
    %129 = vmatpush.bf16.msra.mxu0 %v117
    %130 = vmatpush.bf16.msra.mxu0 %v116
    %131 = vmatpush.bf16.msra.mxu0 %v115
    %132 = vmatpush.bf16.msra.mxu0 %v114
    %133 = vmatmul.bf16.gmra.mxu0 %v123
    %v134 = vpop.f32.mrf.mxu0
    %v135 = vadd.f32 0.0, %v134
    %v136 = vpop.f32.mrf.mxu0
    %v137 = vadd.f32 0.0, %v136
    %138 = vdwg.mxu0
    %v139 = vmul.f32 %v135, %v43
    %v140 = vmul.f32 %v137, %v44
    %143 = vrot.lane.b32.xlu0 %v45, 48
    %v144 = vpop.permute.xlu0 %143
    %145 = vrot.lane.b32.xlu0 %v46, 48
    %v146 = vpop.permute.xlu0 %145
    %v149 = vmul.f32 %v135, %v144
    %v150 = vmul.f32 %v137, %v146
    %153 = vrot.lane.b32.xlu0 %v149, 80
    %v154 = vpop.permute.xlu0 %153
    %155 = vrot.lane.b32.xlu0 %v150, 80
    %v156 = vpop.permute.xlu0 %155
    %v159 = vsub.f32 %v139, %v154
    %v160 = vsub.f32 %v140, %v156
    %v161 = vmul.f32 %v135, %v45
    %v162 = vmul.f32 %v137, %v46
    %165 = vrot.lane.b32.xlu0 %v43, 48
    %v166 = vpop.permute.xlu0 %165
    %167 = vrot.lane.b32.xlu0 %v44, 48
    %v168 = vpop.permute.xlu0 %167
    %v171 = vmul.f32 %v135, %v166
    %v172 = vmul.f32 %v137, %v168
    %175 = vrot.lane.b32.xlu0 %v171, 80
    %v176 = vpop.permute.xlu0 %175
    %177 = vrot.lane.b32.xlu0 %v172, 80
    %v178 = vpop.permute.xlu0 %177
    %v181 = vadd.f32 %v161, %v176
    %v182 = vadd.f32 %v162, %v178
    %185 = vrot.lane.b32.xlu0 %v159, 120
    %v186 = vpop.permute.xlu0 %185
    %187 = vrot.lane.b32.xlu0 %v160, 120
    %v188 = vpop.permute.xlu0 %187
    %191 = vrot.lane.b32.xlu0 %v159, 112
    %v192 = vpop.permute.xlu0 %191
    %193 = vrot.lane.b32.xlu0 %v160, 112
    %v194 = vpop.permute.xlu0 %193
    %197 = vrot.lane.b32.xlu0 %v159, 104
    %v198 = vpop.permute.xlu0 %197
    %199 = vrot.lane.b32.xlu0 %v160, 104
    %v200 = vpop.permute.xlu0 %199
    %203 = vrot.lane.b32.xlu0 %v159, 96
    %v204 = vpop.permute.xlu0 %203
    %205 = vrot.lane.b32.xlu0 %v160, 96
    %v206 = vpop.permute.xlu0 %205
    %209 = vrot.lane.b32.xlu0 %v159, 88
    %v210 = vpop.permute.xlu0 %209
    %211 = vrot.lane.b32.xlu0 %v160, 88
    %v212 = vpop.permute.xlu0 %211
    %v215 = vrot.slane %v192, 4
    %vm216 = vcmask 1047556
    %v217 = vsel %vm216, %v215, %v159
    %v218 = vrot.slane %v159, 4
    %v219 = vsel %vm216, %v192, %v218
    %v221 = vunpack.c.l.s4 1983009808
    %v222 = vunpack.c.0.s8 %v221
    %v223 = vperm.slane %v217, %v222
    %v225 = vunpack.c.l.s4 1983009808
    %v226 = vunpack.c.0.s8 %v225
    %v227 = vperm.slane %v219, %v226
    %v228 = vrot.slane %v198, 4
    %v229 = vsel %vm216, %v228, %v186
    %v230 = vrot.slane %v186, 4
    %v231 = vsel %vm216, %v198, %v230
    %v233 = vunpack.c.l.s4 1983009808
    %v234 = vunpack.c.0.s8 %v233
    %v235 = vperm.slane %v229, %v234
    %v237 = vunpack.c.l.s4 1983009808
    %v238 = vunpack.c.0.s8 %v237
    %v239 = vperm.slane %v231, %v238
    %v240 = vrot.slane %v204, 4
    %v241 = vsel %vm216, 0.0, %v240
    %v243 = vunpack.c.l.s4 1983009808
    %v244 = vunpack.c.0.s8 %v243
    %v245 = vperm.slane %v204, %v244
    %v247 = vunpack.c.l.s4 1983009808
    %v248 = vunpack.c.0.s8 %v247
    %v249 = vperm.slane %v241, %v248
    %v250 = vrot.slane %v210, 4
    %v251 = vsel %vm216, 0.0, %v250
    %v253 = vunpack.c.l.s4 1983009808
    %v254 = vunpack.c.0.s8 %v253
    %v255 = vperm.slane %v210, %v254
    %v257 = vunpack.c.l.s4 1983009808
    %v258 = vunpack.c.0.s8 %v257
    %v259 = vperm.slane %v251, %v258
    %v260 = vrot.slane %v235, 4
    %v261 = vsel %vm216, %v260, %v223
    %v262 = vrot.slane %v223, 4
    %v263 = vsel %vm216, %v235, %v262
    %v265 = vunpack.c.l.s4 1934713408
    %v266 = vunpack.c.0.s8 %v265
    %v267 = vperm.slane %v261, %v266
    %v269 = vunpack.c.l.s4 1934713408
    %v270 = vunpack.c.0.s8 %v269
    %v271 = vperm.slane %v263, %v270
    %v272 = vrot.slane %v239, 4
    %v273 = vsel %vm216, %v272, %v227
    %v274 = vrot.slane %v227, 4
    %v275 = vsel %vm216, %v239, %v274
    %v277 = vunpack.c.l.s4 1934713408
    %v278 = vunpack.c.0.s8 %v277
    %v279 = vperm.slane %v273, %v278
    %v281 = vunpack.c.l.s4 1934713408
    %v282 = vunpack.c.0.s8 %v281
    %v283 = vperm.slane %v275, %v282
    %v284 = vrot.slane %v255, 4
    %v285 = vsel %vm216, %v284, %v245
    %v286 = vrot.slane %v245, 4
    %v287 = vsel %vm216, %v255, %v286
    %v289 = vunpack.c.l.s4 1934713408
    %v290 = vunpack.c.0.s8 %v289
    %v291 = vperm.slane %v285, %v290
    %v293 = vunpack.c.l.s4 1934713408
    %v294 = vunpack.c.0.s8 %v293
    %v295 = vperm.slane %v287, %v294
    %v296 = vrot.slane %v259, 4
    %v297 = vsel %vm216, %v296, %v249
    %v298 = vrot.slane %v249, 4
    %v299 = vsel %vm216, %v259, %v298
    %v301 = vunpack.c.l.s4 1934713408
    %v302 = vunpack.c.0.s8 %v301
    %v303 = vperm.slane %v297, %v302
    %v305 = vunpack.c.l.s4 1934713408
    %v306 = vunpack.c.0.s8 %v305
    %v307 = vperm.slane %v299, %v306
    %v308 = vrot.slane %v291, 4
    %v309 = vsel %vm216, %v308, %v267
    %v310 = vrot.slane %v267, 4
    %v311 = vsel %vm216, %v291, %v310
    %v312 = vrot.slane %v295, 4
    %v313 = vsel %vm216, %v312, %v271
    %v314 = vrot.slane %v271, 4
    %v315 = vsel %vm216, %v295, %v314
    %v316 = vrot.slane %v303, 4
    %v317 = vsel %vm216, %v316, %v279
    %v318 = vrot.slane %v279, 4
    %v319 = vsel %vm216, %v303, %v318
    %v320 = vrot.slane %v307, 4
    %v321 = vsel %vm216, %v320, %v283
    %v322 = vrot.slane %v283, 4
    %v323 = vsel %vm216, %v307, %v322
    %v324 = vrot.slane %v194, 4
    %v325 = vsel %vm216, %v324, %v160
    %v326 = vrot.slane %v160, 4
    %v327 = vsel %vm216, %v194, %v326
    %v329 = vunpack.c.l.s4 1983009808
    %v330 = vunpack.c.0.s8 %v329
    %v331 = vperm.slane %v325, %v330
    %v333 = vunpack.c.l.s4 1983009808
    %v334 = vunpack.c.0.s8 %v333
    %v335 = vperm.slane %v327, %v334
    %v336 = vrot.slane %v200, 4
    %v337 = vsel %vm216, %v336, %v188
    %v338 = vrot.slane %v188, 4
    %v339 = vsel %vm216, %v200, %v338
    %v341 = vunpack.c.l.s4 1983009808
    %v342 = vunpack.c.0.s8 %v341
    %v343 = vperm.slane %v337, %v342
    %v345 = vunpack.c.l.s4 1983009808
    %v346 = vunpack.c.0.s8 %v345
    %v347 = vperm.slane %v339, %v346
    %v348 = vrot.slane %v206, 4
    %v349 = vsel %vm216, 0.0, %v348
    %v351 = vunpack.c.l.s4 1983009808
    %v352 = vunpack.c.0.s8 %v351
    %v353 = vperm.slane %v206, %v352
    %v355 = vunpack.c.l.s4 1983009808
    %v356 = vunpack.c.0.s8 %v355
    %v357 = vperm.slane %v349, %v356
    %v358 = vrot.slane %v212, 4
    %v359 = vsel %vm216, 0.0, %v358
    %v361 = vunpack.c.l.s4 1983009808
    %v362 = vunpack.c.0.s8 %v361
    %v363 = vperm.slane %v212, %v362
    %v365 = vunpack.c.l.s4 1983009808
    %v366 = vunpack.c.0.s8 %v365
    %v367 = vperm.slane %v359, %v366
    %v368 = vrot.slane %v343, 4
    %v369 = vsel %vm216, %v368, %v331
    %v370 = vrot.slane %v331, 4
    %v371 = vsel %vm216, %v343, %v370
    %v373 = vunpack.c.l.s4 1934713408
    %v374 = vunpack.c.0.s8 %v373
    %v375 = vperm.slane %v369, %v374
    %v377 = vunpack.c.l.s4 1934713408
    %v378 = vunpack.c.0.s8 %v377
    %v379 = vperm.slane %v371, %v378
    %v380 = vrot.slane %v347, 4
    %v381 = vsel %vm216, %v380, %v335
    %v382 = vrot.slane %v335, 4
    %v383 = vsel %vm216, %v347, %v382
    %v385 = vunpack.c.l.s4 1934713408
    %v386 = vunpack.c.0.s8 %v385
    %v387 = vperm.slane %v381, %v386
    %v389 = vunpack.c.l.s4 1934713408
    %v390 = vunpack.c.0.s8 %v389
    %v391 = vperm.slane %v383, %v390
    %v392 = vrot.slane %v363, 4
    %v393 = vsel %vm216, %v392, %v353
    %v394 = vrot.slane %v353, 4
    %v395 = vsel %vm216, %v363, %v394
    %v397 = vunpack.c.l.s4 1934713408
    %v398 = vunpack.c.0.s8 %v397
    %v399 = vperm.slane %v393, %v398
    %v401 = vunpack.c.l.s4 1934713408
    %v402 = vunpack.c.0.s8 %v401
    %v403 = vperm.slane %v395, %v402
    %v404 = vrot.slane %v367, 4
    %v405 = vsel %vm216, %v404, %v357
    %v406 = vrot.slane %v357, 4
    %v407 = vsel %vm216, %v367, %v406
    %v409 = vunpack.c.l.s4 1934713408
    %v410 = vunpack.c.0.s8 %v409
    %v411 = vperm.slane %v405, %v410
    %v413 = vunpack.c.l.s4 1934713408
    %v414 = vunpack.c.0.s8 %v413
    %v415 = vperm.slane %v407, %v414
    %v416 = vrot.slane %v399, 4
    %v417 = vsel %vm216, %v416, %v375
    %v418 = vrot.slane %v375, 4
    %v419 = vsel %vm216, %v399, %v418
    %v420 = vrot.slane %v403, 4
    %v421 = vsel %vm216, %v420, %v379
    %v422 = vrot.slane %v379, 4
    %v423 = vsel %vm216, %v403, %v422
    %v424 = vrot.slane %v411, 4
    %v425 = vsel %vm216, %v424, %v387
    %v426 = vrot.slane %v387, 4
    %v427 = vsel %vm216, %v411, %v426
    %v428 = vrot.slane %v415, 4
    %v429 = vsel %vm216, %v428, %v391
    %v430 = vrot.slane %v391, 4
    %v431 = vsel %vm216, %v415, %v430
    %434 = vrot.lane.b32.xlu0 %v181, 120
    %v435 = vpop.permute.xlu0 %434
    %436 = vrot.lane.b32.xlu0 %v182, 120
    %v437 = vpop.permute.xlu0 %436
    %440 = vrot.lane.b32.xlu0 %v181, 112
    %v441 = vpop.permute.xlu0 %440
    %442 = vrot.lane.b32.xlu0 %v182, 112
    %v443 = vpop.permute.xlu0 %442
    %446 = vrot.lane.b32.xlu0 %v181, 104
    %v447 = vpop.permute.xlu0 %446
    %448 = vrot.lane.b32.xlu0 %v182, 104
    %v449 = vpop.permute.xlu0 %448
    %452 = vrot.lane.b32.xlu0 %v181, 96
    %v453 = vpop.permute.xlu0 %452
    %454 = vrot.lane.b32.xlu0 %v182, 96
    %v455 = vpop.permute.xlu0 %454
    %458 = vrot.lane.b32.xlu0 %v181, 88
    %v459 = vpop.permute.xlu0 %458
    %460 = vrot.lane.b32.xlu0 %v182, 88
    %v461 = vpop.permute.xlu0 %460
    %v464 = vrot.slane %v441, 4
    %v465 = vsel %vm216, %v464, %v181
    %v466 = vrot.slane %v181, 4
    %v467 = vsel %vm216, %v441, %v466
    %v469 = vunpack.c.l.s4 1983009808
    %v470 = vunpack.c.0.s8 %v469
    %v471 = vperm.slane %v465, %v470
    %v473 = vunpack.c.l.s4 1983009808
    %v474 = vunpack.c.0.s8 %v473
    %v475 = vperm.slane %v467, %v474
    %v476 = vrot.slane %v447, 4
    %v477 = vsel %vm216, %v476, %v435
    %v478 = vrot.slane %v435, 4
    %v479 = vsel %vm216, %v447, %v478
    %v481 = vunpack.c.l.s4 1983009808
    %v482 = vunpack.c.0.s8 %v481
    %v483 = vperm.slane %v477, %v482
    %v485 = vunpack.c.l.s4 1983009808
    %v486 = vunpack.c.0.s8 %v485
    %v487 = vperm.slane %v479, %v486
    %v488 = vrot.slane %v453, 4
    %v489 = vsel %vm216, 0.0, %v488
    %v491 = vunpack.c.l.s4 1983009808
    %v492 = vunpack.c.0.s8 %v491
    %v493 = vperm.slane %v453, %v492
    %v495 = vunpack.c.l.s4 1983009808
    %v496 = vunpack.c.0.s8 %v495
    %v497 = vperm.slane %v489, %v496
    %v498 = vrot.slane %v459, 4
    %v499 = vsel %vm216, 0.0, %v498
    %v501 = vunpack.c.l.s4 1983009808
    %v502 = vunpack.c.0.s8 %v501
    %v503 = vperm.slane %v459, %v502
    %v505 = vunpack.c.l.s4 1983009808
    %v506 = vunpack.c.0.s8 %v505
    %v507 = vperm.slane %v499, %v506
    %v508 = vrot.slane %v483, 4
    %v509 = vsel %vm216, %v508, %v471
    %v510 = vrot.slane %v471, 4
    %v511 = vsel %vm216, %v483, %v510
    %v513 = vunpack.c.l.s4 1934713408
    %v514 = vunpack.c.0.s8 %v513
    %v515 = vperm.slane %v509, %v514
    %v517 = vunpack.c.l.s4 1934713408
    %v518 = vunpack.c.0.s8 %v517
    %v519 = vperm.slane %v511, %v518
    %v520 = vrot.slane %v487, 4
    %v521 = vsel %vm216, %v520, %v475
    %v522 = vrot.slane %v475, 4
    %v523 = vsel %vm216, %v487, %v522
    %v525 = vunpack.c.l.s4 1934713408
    %v526 = vunpack.c.0.s8 %v525
    %v527 = vperm.slane %v521, %v526
    %v529 = vunpack.c.l.s4 1934713408
    %v530 = vunpack.c.0.s8 %v529
    %v531 = vperm.slane %v523, %v530
    %v532 = vrot.slane %v503, 4
    %v533 = vsel %vm216, %v532, %v493
    %v534 = vrot.slane %v493, 4
    %v535 = vsel %vm216, %v503, %v534
    %v537 = vunpack.c.l.s4 1934713408
    %v538 = vunpack.c.0.s8 %v537
    %v539 = vperm.slane %v533, %v538
    %v541 = vunpack.c.l.s4 1934713408
    %v542 = vunpack.c.0.s8 %v541
    %v543 = vperm.slane %v535, %v542
    %v544 = vrot.slane %v507, 4
    %v545 = vsel %vm216, %v544, %v497
    %v546 = vrot.slane %v497, 4
    %v547 = vsel %vm216, %v507, %v546
    %v549 = vunpack.c.l.s4 1934713408
    %v550 = vunpack.c.0.s8 %v549
    %v551 = vperm.slane %v545, %v550
    %v553 = vunpack.c.l.s4 1934713408
    %v554 = vunpack.c.0.s8 %v553
    %v555 = vperm.slane %v547, %v554
    %v556 = vrot.slane %v539, 4
    %v557 = vsel %vm216, %v556, %v515
    %v558 = vrot.slane %v515, 4
    %v559 = vsel %vm216, %v539, %v558
    %v560 = vrot.slane %v543, 4
    %v561 = vsel %vm216, %v560, %v519
    %v562 = vrot.slane %v519, 4
    %v563 = vsel %vm216, %v543, %v562
    %v564 = vrot.slane %v551, 4
    %v565 = vsel %vm216, %v564, %v527
    %v566 = vrot.slane %v527, 4
    %v567 = vsel %vm216, %v551, %v566
    %v568 = vrot.slane %v555, 4
    %v569 = vsel %vm216, %v568, %v531
    %v570 = vrot.slane %v531, 4
    %v571 = vsel %vm216, %v555, %v570
    %v572 = vrot.slane %v443, 4
    %v573 = vsel %vm216, %v572, %v182
    %v574 = vrot.slane %v182, 4
    %v575 = vsel %vm216, %v443, %v574
    %v577 = vunpack.c.l.s4 1983009808
    %v578 = vunpack.c.0.s8 %v577
    %v579 = vperm.slane %v573, %v578
    %v581 = vunpack.c.l.s4 1983009808
    %v582 = vunpack.c.0.s8 %v581
    %v583 = vperm.slane %v575, %v582
    %v584 = vrot.slane %v449, 4
    %v585 = vsel %vm216, %v584, %v437
    %v586 = vrot.slane %v437, 4
    %v587 = vsel %vm216, %v449, %v586
    %v589 = vunpack.c.l.s4 1983009808
    %v590 = vunpack.c.0.s8 %v589
    %v591 = vperm.slane %v585, %v590
    %v593 = vunpack.c.l.s4 1983009808
    %v594 = vunpack.c.0.s8 %v593
    %v595 = vperm.slane %v587, %v594
    %v596 = vrot.slane %v455, 4
    %v597 = vsel %vm216, 0.0, %v596
    %v599 = vunpack.c.l.s4 1983009808
    %v600 = vunpack.c.0.s8 %v599
    %v601 = vperm.slane %v455, %v600
    %v603 = vunpack.c.l.s4 1983009808
    %v604 = vunpack.c.0.s8 %v603
    %v605 = vperm.slane %v597, %v604
    %v606 = vrot.slane %v461, 4
    %v607 = vsel %vm216, 0.0, %v606
    %v609 = vunpack.c.l.s4 1983009808
    %v610 = vunpack.c.0.s8 %v609
    %v611 = vperm.slane %v461, %v610
    %v613 = vunpack.c.l.s4 1983009808
    %v614 = vunpack.c.0.s8 %v613
    %v615 = vperm.slane %v607, %v614
    %v616 = vrot.slane %v591, 4
    %v617 = vsel %vm216, %v616, %v579
    %v618 = vrot.slane %v579, 4
    %v619 = vsel %vm216, %v591, %v618
    %v621 = vunpack.c.l.s4 1934713408
    %v622 = vunpack.c.0.s8 %v621
    %v623 = vperm.slane %v617, %v622
    %v625 = vunpack.c.l.s4 1934713408
    %v626 = vunpack.c.0.s8 %v625
    %v627 = vperm.slane %v619, %v626
    %v628 = vrot.slane %v595, 4
    %v629 = vsel %vm216, %v628, %v583
    %v630 = vrot.slane %v583, 4
    %v631 = vsel %vm216, %v595, %v630
    %v633 = vunpack.c.l.s4 1934713408
    %v634 = vunpack.c.0.s8 %v633
    %v635 = vperm.slane %v629, %v634
    %v637 = vunpack.c.l.s4 1934713408
    %v638 = vunpack.c.0.s8 %v637
    %v639 = vperm.slane %v631, %v638
    %v640 = vrot.slane %v611, 4
    %v641 = vsel %vm216, %v640, %v601
    %v642 = vrot.slane %v601, 4
    %v643 = vsel %vm216, %v611, %v642
    %v645 = vunpack.c.l.s4 1934713408
    %v646 = vunpack.c.0.s8 %v645
    %v647 = vperm.slane %v641, %v646
    %v649 = vunpack.c.l.s4 1934713408
    %v650 = vunpack.c.0.s8 %v649
    %v651 = vperm.slane %v643, %v650
    %v652 = vrot.slane %v615, 4
    %v653 = vsel %vm216, %v652, %v605
    %v654 = vrot.slane %v605, 4
    %v655 = vsel %vm216, %v615, %v654
    %v657 = vunpack.c.l.s4 1934713408
    %v658 = vunpack.c.0.s8 %v657
    %v659 = vperm.slane %v653, %v658
    %v661 = vunpack.c.l.s4 1934713408
    %v662 = vunpack.c.0.s8 %v661
    %v663 = vperm.slane %v655, %v662
    %v664 = vrot.slane %v647, 4
    %v665 = vsel %vm216, %v664, %v623
    %v666 = vrot.slane %v623, 4
    %v667 = vsel %vm216, %v647, %v666
    %v668 = vrot.slane %v651, 4
    %v669 = vsel %vm216, %v668, %v627
    %v670 = vrot.slane %v627, 4
    %v671 = vsel %vm216, %v651, %v670
    %v672 = vrot.slane %v659, 4
    %v673 = vsel %vm216, %v672, %v635
    %v674 = vrot.slane %v635, 4
    %v675 = vsel %vm216, %v659, %v674
    %v676 = vrot.slane %v663, 4
    %v677 = vsel %vm216, %v676, %v639
    %v678 = vrot.slane %v639, 4
    %v679 = vsel %vm216, %v663, %v678
    %696 = vrot.lane.b32.xlu0 %v557, 8
    %v697 = vpop.permute.xlu0 %696
    %698 = vrot.lane.b32.xlu0 %v559, 8
    %v699 = vpop.permute.xlu0 %698
    %700 = vrot.lane.b32.xlu0 %v561, 8
    %v701 = vpop.permute.xlu0 %700
    %702 = vrot.lane.b32.xlu0 %v563, 8
    %v703 = vpop.permute.xlu0 %702
    %704 = vrot.lane.b32.xlu0 %v565, 8
    %v705 = vpop.permute.xlu0 %704
    %706 = vrot.lane.b32.xlu0 %v567, 8
    %v707 = vpop.permute.xlu0 %706
    %708 = vrot.lane.b32.xlu0 %v569, 8
    %v709 = vpop.permute.xlu0 %708
    %710 = vrot.lane.b32.xlu0 %v571, 8
    %v711 = vpop.permute.xlu0 %710
    %712 = vrot.lane.b32.xlu0 %v665, 8
    %v713 = vpop.permute.xlu0 %712
    %714 = vrot.lane.b32.xlu0 %v667, 8
    %v715 = vpop.permute.xlu0 %714
    %716 = vrot.lane.b32.xlu0 %v669, 8
    %v717 = vpop.permute.xlu0 %716
    %718 = vrot.lane.b32.xlu0 %v671, 8
    %v719 = vpop.permute.xlu0 %718
    %720 = vrot.lane.b32.xlu0 %v673, 8
    %v721 = vpop.permute.xlu0 %720
    %722 = vrot.lane.b32.xlu0 %v675, 8
    %v723 = vpop.permute.xlu0 %722
    %724 = vrot.lane.b32.xlu0 %v677, 8
    %v725 = vpop.permute.xlu0 %724
    %726 = vrot.lane.b32.xlu0 %v679, 8
    %v727 = vpop.permute.xlu0 %726
    %vm744 = vcmask 64512
    %v745 = vsel %vm744, %v309, %v697
    %v746 = vsel %vm744, %v311, %v699
    %v747 = vsel %vm744, %v313, %v701
    %v748 = vsel %vm744, %v315, %v703
    %v749 = vsel %vm744, %v317, %v705
    %v750 = vsel %vm744, %v319, %v707
    %v751 = vsel %vm744, %v321, %v709
    %v752 = vsel %vm744, %v323, %v711
    %v753 = vsel %vm744, %v417, %v713
    %v754 = vsel %vm744, %v419, %v715
    %v755 = vsel %vm744, %v421, %v717
    %v756 = vsel %vm744, %v423, %v719
    %v757 = vsel %vm744, %v425, %v721
    %v758 = vsel %vm744, %v427, %v723
    %v759 = vsel %vm744, %v429, %v725
    %v760 = vsel %vm744, %v431, %v727
    %v761 = vrot.slane %v747, 4
    %v762 = vsel %vm216, %v761, %v745
    %v763 = vrot.slane %v745, 4
    %v764 = vsel %vm216, %v747, %v763
    %v766 = vunpack.c.l.s4 1983009808
    %v767 = vunpack.c.0.s8 %v766
    %v768 = vperm.slane %v762, %v767
    %v770 = vunpack.c.l.s4 1983009808
    %v771 = vunpack.c.0.s8 %v770
    %v772 = vperm.slane %v764, %v771
    %v773 = vrot.slane %v748, 4
    %v774 = vsel %vm216, %v773, %v746
    %v775 = vrot.slane %v746, 4
    %v776 = vsel %vm216, %v748, %v775
    %v778 = vunpack.c.l.s4 1983009808
    %v779 = vunpack.c.0.s8 %v778
    %v780 = vperm.slane %v774, %v779
    %v782 = vunpack.c.l.s4 1983009808
    %v783 = vunpack.c.0.s8 %v782
    %v784 = vperm.slane %v776, %v783
    %v785 = vrot.slane %v751, 4
    %v786 = vsel %vm216, %v785, %v749
    %v787 = vrot.slane %v749, 4
    %v788 = vsel %vm216, %v751, %v787
    %v790 = vunpack.c.l.s4 1983009808
    %v791 = vunpack.c.0.s8 %v790
    %v792 = vperm.slane %v786, %v791
    %v794 = vunpack.c.l.s4 1983009808
    %v795 = vunpack.c.0.s8 %v794
    %v796 = vperm.slane %v788, %v795
    %v797 = vrot.slane %v752, 4
    %v798 = vsel %vm216, %v797, %v750
    %v799 = vrot.slane %v750, 4
    %v800 = vsel %vm216, %v752, %v799
    %v802 = vunpack.c.l.s4 1983009808
    %v803 = vunpack.c.0.s8 %v802
    %v804 = vperm.slane %v798, %v803
    %v806 = vunpack.c.l.s4 1983009808
    %v807 = vunpack.c.0.s8 %v806
    %v808 = vperm.slane %v800, %v807
    %v809 = vrot.slane %v780, 4
    %v810 = vsel %vm216, %v809, %v768
    %v811 = vrot.slane %v768, 4
    %v812 = vsel %vm216, %v780, %v811
    %v814 = vunpack.c.l.s4 1934713408
    %v815 = vunpack.c.0.s8 %v814
    %v816 = vperm.slane %v810, %v815
    %v818 = vunpack.c.l.s4 1934713408
    %v819 = vunpack.c.0.s8 %v818
    %v820 = vperm.slane %v812, %v819
    %v821 = vrot.slane %v784, 4
    %v822 = vsel %vm216, %v821, %v772
    %v824 = vunpack.c.l.s4 1934713408
    %v825 = vunpack.c.0.s8 %v824
    %v826 = vperm.slane %v822, %v825
    %v827 = vrot.slane %v804, 4
    %v828 = vsel %vm216, %v827, %v792
    %v829 = vrot.slane %v792, 4
    %v830 = vsel %vm216, %v804, %v829
    %v832 = vunpack.c.l.s4 1934713408
    %v833 = vunpack.c.0.s8 %v832
    %v834 = vperm.slane %v828, %v833
    %v836 = vunpack.c.l.s4 1934713408
    %v837 = vunpack.c.0.s8 %v836
    %v838 = vperm.slane %v830, %v837
    %v839 = vrot.slane %v808, 4
    %v840 = vsel %vm216, %v839, %v796
    %v842 = vunpack.c.l.s4 1934713408
    %v843 = vunpack.c.0.s8 %v842
    %v844 = vperm.slane %v840, %v843
    %v845 = vrot.slane %v834, 4
    %v846 = vsel %vm216, %v845, %v816
    %v847 = vrot.slane %v816, 4
    %v848 = vsel %vm216, %v834, %v847
    %v849 = vrot.slane %v838, 4
    %v850 = vsel %vm216, %v849, %v820
    %v851 = vrot.slane %v820, 4
    %v852 = vsel %vm216, %v838, %v851
    %v853 = vrot.slane %v844, 4
    %v854 = vsel %vm216, %v853, %v826
    %v855 = vrot.slane %v826, 4
    %v856 = vsel %vm216, %v844, %v855
    %v857 = vrot.slane %v755, 4
    %v858 = vsel %vm216, %v857, %v753
    %v859 = vrot.slane %v753, 4
    %v860 = vsel %vm216, %v755, %v859
    %v862 = vunpack.c.l.s4 1983009808
    %v863 = vunpack.c.0.s8 %v862
    %v864 = vperm.slane %v858, %v863
    %v866 = vunpack.c.l.s4 1983009808
    %v867 = vunpack.c.0.s8 %v866
    %v868 = vperm.slane %v860, %v867
    %v869 = vrot.slane %v756, 4
    %v870 = vsel %vm216, %v869, %v754
    %v871 = vrot.slane %v754, 4
    %v872 = vsel %vm216, %v756, %v871
    %v874 = vunpack.c.l.s4 1983009808
    %v875 = vunpack.c.0.s8 %v874
    %v876 = vperm.slane %v870, %v875
    %v878 = vunpack.c.l.s4 1983009808
    %v879 = vunpack.c.0.s8 %v878
    %v880 = vperm.slane %v872, %v879
    %v881 = vrot.slane %v759, 4
    %v882 = vsel %vm216, %v881, %v757
    %v883 = vrot.slane %v757, 4
    %v884 = vsel %vm216, %v759, %v883
    %v886 = vunpack.c.l.s4 1983009808
    %v887 = vunpack.c.0.s8 %v886
    %v888 = vperm.slane %v882, %v887
    %v890 = vunpack.c.l.s4 1983009808
    %v891 = vunpack.c.0.s8 %v890
    %v892 = vperm.slane %v884, %v891
    %v893 = vrot.slane %v760, 4
    %v894 = vsel %vm216, %v893, %v758
    %v895 = vrot.slane %v758, 4
    %v896 = vsel %vm216, %v760, %v895
    %v898 = vunpack.c.l.s4 1983009808
    %v899 = vunpack.c.0.s8 %v898
    %v900 = vperm.slane %v894, %v899
    %v902 = vunpack.c.l.s4 1983009808
    %v903 = vunpack.c.0.s8 %v902
    %v904 = vperm.slane %v896, %v903
    %v905 = vrot.slane %v876, 4
    %v906 = vsel %vm216, %v905, %v864
    %v907 = vrot.slane %v864, 4
    %v908 = vsel %vm216, %v876, %v907
    %v910 = vunpack.c.l.s4 1934713408
    %v911 = vunpack.c.0.s8 %v910
    %v912 = vperm.slane %v906, %v911
    %v914 = vunpack.c.l.s4 1934713408
    %v915 = vunpack.c.0.s8 %v914
    %v916 = vperm.slane %v908, %v915
    %v917 = vrot.slane %v880, 4
    %v918 = vsel %vm216, %v917, %v868
    %v920 = vunpack.c.l.s4 1934713408
    %v921 = vunpack.c.0.s8 %v920
    %v922 = vperm.slane %v918, %v921
    %v923 = vrot.slane %v900, 4
    %v924 = vsel %vm216, %v923, %v888
    %v925 = vrot.slane %v888, 4
    %v926 = vsel %vm216, %v900, %v925
    %v928 = vunpack.c.l.s4 1934713408
    %v929 = vunpack.c.0.s8 %v928
    %v930 = vperm.slane %v924, %v929
    %v932 = vunpack.c.l.s4 1934713408
    %v933 = vunpack.c.0.s8 %v932
    %v934 = vperm.slane %v926, %v933
    %v935 = vrot.slane %v904, 4
    %v936 = vsel %vm216, %v935, %v892
    %v938 = vunpack.c.l.s4 1934713408
    %v939 = vunpack.c.0.s8 %v938
    %v940 = vperm.slane %v936, %v939
    %v941 = vrot.slane %v930, 4
    %v942 = vsel %vm216, %v941, %v912
    %v943 = vrot.slane %v912, 4
    %v944 = vsel %vm216, %v930, %v943
    %v945 = vrot.slane %v934, 4
    %v946 = vsel %vm216, %v945, %v916
    %v947 = vrot.slane %v916, 4
    %v948 = vsel %vm216, %v934, %v947
    %v949 = vrot.slane %v940, 4
    %v950 = vsel %vm216, %v949, %v922
    %v951 = vrot.slane %v922, 4
    %v952 = vsel %vm216, %v940, %v951
    %v953 = vpack.c.bf16 %v846, %v846
    %v954 = vpack.c.bf16 %v942, %v942
    %v955 = vpack.c.bf16 %v848, %v848
    %v956 = vpack.c.bf16 %v944, %v944
    %v957 = vpack.c.bf16 %v850, %v850
    %v958 = vpack.c.bf16 %v946, %v946
    %v959 = vpack.c.bf16 %v852, %v852
    %v960 = vpack.c.bf16 %v948, %v948
    %v961 = vpack.c.bf16 %v854, %v854
    %v962 = vpack.c.bf16 %v950, %v950
    %v963 = vpack.c.bf16 %v856, %v856
    %v964 = vpack.c.bf16 %v952, %v952
    %967 = vrot.lane.b32.xlu0 %v135, 112
    %v968 = vpop.permute.xlu0 %967
    %969 = vrot.lane.b32.xlu0 %v137, 112
    %v970 = vpop.permute.xlu0 %969
    %971 = vrot.lane.b32.xlu0 %v135, 32
    %v972 = vpop.permute.xlu0 %971
    %973 = vrot.lane.b32.xlu0 %v137, 32
    %v974 = vpop.permute.xlu0 %973
    %975 = vrot.lane.b32.xlu0 %v968, 32
    %v976 = vpop.permute.xlu0 %975
    %977 = vrot.lane.b32.xlu0 %v970, 32
    %v978 = vpop.permute.xlu0 %977
    %v983 = vrot.slane %v972, 4
    %v984 = vsel %vm216, 0.0, %v983
    %v986 = vunpack.c.l.s4 1983009808
    %v987 = vunpack.c.0.s8 %v986
    %v988 = vperm.slane %v972, %v987
    %v990 = vunpack.c.l.s4 1983009808
    %v991 = vunpack.c.0.s8 %v990
    %v992 = vperm.slane %v984, %v991
    %v993 = vrot.slane %v976, 4
    %v994 = vsel %vm216, 0.0, %v993
    %v996 = vunpack.c.l.s4 1983009808
    %v997 = vunpack.c.0.s8 %v996
    %v998 = vperm.slane %v976, %v997
    %v1000 = vunpack.c.l.s4 1983009808
    %v1001 = vunpack.c.0.s8 %v1000
    %v1002 = vperm.slane %v994, %v1001
    %v1003 = vrot.slane %v998, 4
    %v1004 = vsel %vm216, %v1003, %v988
    %v1005 = vrot.slane %v988, 4
    %v1006 = vsel %vm216, %v998, %v1005
    %v1008 = vunpack.c.l.s4 1934713408
    %v1009 = vunpack.c.0.s8 %v1008
    %v1010 = vperm.slane %v1004, %v1009
    %v1012 = vunpack.c.l.s4 1934713408
    %v1013 = vunpack.c.0.s8 %v1012
    %v1014 = vperm.slane %v1006, %v1013
    %v1015 = vrot.slane %v1002, 4
    %v1016 = vsel %vm216, %v1015, %v992
    %v1017 = vrot.slane %v992, 4
    %v1018 = vsel %vm216, %v1002, %v1017
    %v1020 = vunpack.c.l.s4 1934713408
    %v1021 = vunpack.c.0.s8 %v1020
    %v1022 = vperm.slane %v1016, %v1021
    %v1024 = vunpack.c.l.s4 1934713408
    %v1025 = vunpack.c.0.s8 %v1024
    %v1026 = vperm.slane %v1018, %v1025
    %v1027 = vrot.slane %v1010, 4
    %v1028 = vsel %vm216, 0.0, %v1027
    %v1029 = vrot.slane %v1014, 4
    %v1030 = vsel %vm216, 0.0, %v1029
    %v1031 = vrot.slane %v1022, 4
    %v1032 = vsel %vm216, 0.0, %v1031
    %v1033 = vrot.slane %v1026, 4
    %v1034 = vsel %vm216, 0.0, %v1033
    %v1035 = vrot.slane %v974, 4
    %v1036 = vsel %vm216, 0.0, %v1035
    %v1038 = vunpack.c.l.s4 1983009808
    %v1039 = vunpack.c.0.s8 %v1038
    %v1040 = vperm.slane %v974, %v1039
    %v1042 = vunpack.c.l.s4 1983009808
    %v1043 = vunpack.c.0.s8 %v1042
    %v1044 = vperm.slane %v1036, %v1043
    %v1045 = vrot.slane %v978, 4
    %v1046 = vsel %vm216, 0.0, %v1045
    %v1048 = vunpack.c.l.s4 1983009808
    %v1049 = vunpack.c.0.s8 %v1048
    %v1050 = vperm.slane %v978, %v1049
    %v1052 = vunpack.c.l.s4 1983009808
    %v1053 = vunpack.c.0.s8 %v1052
    %v1054 = vperm.slane %v1046, %v1053
    %v1055 = vrot.slane %v1050, 4
    %v1056 = vsel %vm216, %v1055, %v1040
    %v1057 = vrot.slane %v1040, 4
    %v1058 = vsel %vm216, %v1050, %v1057
    %v1060 = vunpack.c.l.s4 1934713408
    %v1061 = vunpack.c.0.s8 %v1060
    %v1062 = vperm.slane %v1056, %v1061
    %v1064 = vunpack.c.l.s4 1934713408
    %v1065 = vunpack.c.0.s8 %v1064
    %v1066 = vperm.slane %v1058, %v1065
    %v1067 = vrot.slane %v1054, 4
    %v1068 = vsel %vm216, %v1067, %v1044
    %v1069 = vrot.slane %v1044, 4
    %v1070 = vsel %vm216, %v1054, %v1069
    %v1072 = vunpack.c.l.s4 1934713408
    %v1073 = vunpack.c.0.s8 %v1072
    %v1074 = vperm.slane %v1068, %v1073
    %v1076 = vunpack.c.l.s4 1934713408
    %v1077 = vunpack.c.0.s8 %v1076
    %v1078 = vperm.slane %v1070, %v1077
    %v1079 = vrot.slane %v1062, 4
    %v1080 = vsel %vm216, 0.0, %v1079
    %v1081 = vrot.slane %v1066, 4
    %v1082 = vsel %vm216, 0.0, %v1081
    %v1083 = vrot.slane %v1074, 4
    %v1084 = vsel %vm216, 0.0, %v1083
    %v1085 = vrot.slane %v1078, 4
    %v1086 = vsel %vm216, 0.0, %v1085
    %v1087 = vsel %vm216, %v1029, %v1010
    %v1089 = vunpack.c.l.s4 1983009808
    %v1090 = vunpack.c.0.s8 %v1089
    %v1091 = vperm.slane %v1087, %v1090
    %v1092 = vrot.slane %v1030, 4
    %v1093 = vsel %vm216, %v1092, %v1028
    %v1095 = vunpack.c.l.s4 1983009808
    %v1096 = vunpack.c.0.s8 %v1095
    %v1097 = vperm.slane %v1093, %v1096
    %v1098 = vsel %vm216, %v1033, %v1022
    %v1100 = vunpack.c.l.s4 1983009808
    %v1101 = vunpack.c.0.s8 %v1100
    %v1102 = vperm.slane %v1098, %v1101
    %v1103 = vrot.slane %v1034, 4
    %v1104 = vsel %vm216, %v1103, %v1032
    %v1106 = vunpack.c.l.s4 1983009808
    %v1107 = vunpack.c.0.s8 %v1106
    %v1108 = vperm.slane %v1104, %v1107
    %v1109 = vrot.slane %v1097, 4
    %v1110 = vsel %vm216, %v1109, %v1091
    %v1112 = vunpack.c.l.s4 1934713408
    %v1113 = vunpack.c.0.s8 %v1112
    %v1114 = vperm.slane %v1110, %v1113
    %v1115 = vrot.slane %v1108, 4
    %v1116 = vsel %vm216, %v1115, %v1102
    %v1118 = vunpack.c.l.s4 1934713408
    %v1119 = vunpack.c.0.s8 %v1118
    %v1120 = vperm.slane %v1116, %v1119
    %v1121 = vrot.slane %v1120, 4
    %v1122 = vsel %vm216, %v1121, %v1114
    %v1123 = vrot.slane %v1114, 4
    %v1124 = vsel %vm216, %v1120, %v1123
    %v1125 = vsel %vm216, %v1081, %v1062
    %v1127 = vunpack.c.l.s4 1983009808
    %v1128 = vunpack.c.0.s8 %v1127
    %v1129 = vperm.slane %v1125, %v1128
    %v1130 = vrot.slane %v1082, 4
    %v1131 = vsel %vm216, %v1130, %v1080
    %v1133 = vunpack.c.l.s4 1983009808
    %v1134 = vunpack.c.0.s8 %v1133
    %v1135 = vperm.slane %v1131, %v1134
    %v1136 = vsel %vm216, %v1085, %v1074
    %v1138 = vunpack.c.l.s4 1983009808
    %v1139 = vunpack.c.0.s8 %v1138
    %v1140 = vperm.slane %v1136, %v1139
    %v1141 = vrot.slane %v1086, 4
    %v1142 = vsel %vm216, %v1141, %v1084
    %v1144 = vunpack.c.l.s4 1983009808
    %v1145 = vunpack.c.0.s8 %v1144
    %v1146 = vperm.slane %v1142, %v1145
    %v1147 = vrot.slane %v1135, 4
    %v1148 = vsel %vm216, %v1147, %v1129
    %v1150 = vunpack.c.l.s4 1934713408
    %v1151 = vunpack.c.0.s8 %v1150
    %v1152 = vperm.slane %v1148, %v1151
    %v1153 = vrot.slane %v1146, 4
    %v1154 = vsel %vm216, %v1153, %v1140
    %v1156 = vunpack.c.l.s4 1934713408
    %v1157 = vunpack.c.0.s8 %v1156
    %v1158 = vperm.slane %v1154, %v1157
    %v1159 = vrot.slane %v1158, 4
    %v1160 = vsel %vm216, %v1159, %v1152
    %v1161 = vrot.slane %v1152, 4
    %v1162 = vsel %vm216, %v1158, %v1161
    %v1163 = vpack.c.bf16 %v1160, %v1122
    %v1164 = vpack.c.bf16 %v1162, %v1124
    %v1165 = vld [vmem:[%s1] sm:$0xff]
    %v1166 = vld [vmem:[%s1 + $0x8] sm:$0xff]
    %v1167 = vld [vmem:[%s1 + $0x10] sm:$0xff]
    %v1168 = vld [vmem:[%s1 + $0x18] sm:$0xff]
    %v1169 = vld [vmem:[%s1 + $0x20] sm:$0xff]
    %v1170 = vld [vmem:[%s1 + $0x28] sm:$0xff]
    %v1171 = vld [vmem:[%s1 + $0x30] sm:$0xff]
    %v1172 = vld [vmem:[%s1 + $0x38] sm:$0xff]
    %v1181 = vunpack.c.l.b16 %v953
    %v1182 = vunpack.c.l.b16 %v954
    %v1183 = vunpack.c.l.b16 %v955
    %v1184 = vunpack.c.l.b16 %v956
    %v1185 = vunpack.c.l.b16 %v957
    %v1186 = vunpack.c.l.b16 %v958
    %v1187 = vunpack.c.l.b16 %v959
    %v1188 = vunpack.c.l.b16 %v960
    %v1189 = vpack.c.b16 %v1182, %v1181
    %v1190 = vpack.c.b16 %v1184, %v1183
    %v1191 = vpack.c.b16 %v1186, %v1185
    %v1192 = vpack.c.b16 %v1188, %v1187
    %v1197 = vunpack.c.l.b16 %v961
    %v1198 = vunpack.c.l.b16 %v962
    %v1199 = vunpack.c.l.b16 %v963
    %v1200 = vunpack.c.l.b16 %v964
    %v1201 = vpack.c.b16 %v1198, %v1197
    %v1202 = vpack.c.b16 %v1200, %v1199
    %vm1203 = vcmask 130048
    %v1205 = vsel %vm1203, %v1189, 0
    %v1208 = vsel %vm1203, %v1190, 0
    %v1211 = vsel %vm1203, %v1191, 0
    %v1214 = vsel %vm1203, %v1192, 0
    %v1217 = vsel %vm1203, %v1201, 0
    %v1220 = vsel %vm1203, %v1202, 0
    %1222 = vmatpush.bf16.xpose.msra.mxu0 0
    %1223 = vmatpush.bf16.xpose.msra.mxu0 0
    %1224 = vmatpush.bf16.xpose.msra.mxu0 0
    %1225 = vmatpush.bf16.xpose.msra.mxu0 0
    %1226 = vmatpush.bf16.xpose.msra.mxu0 0
    %1227 = vmatpush.bf16.xpose.msra.mxu0 0
    %1228 = vmatpush.bf16.xpose.msra.mxu0 %v1220
    %1229 = vmatpush.bf16.xpose.msra.mxu0 %v1217
    %1230 = vmatmul.bf16.gmra.mxu0 %v1205
    %v1231 = vpop.f32.mrf.mxu0
    %v1232 = vadd.f32 %v1165, %v1231
    %v1233 = vpop.f32.mrf.mxu0
    %v1234 = vadd.f32 %v1166, %v1233
    %1235 = vmatmul.bf16.gmra.mxu0 %v1208
    %v1236 = vpop.f32.mrf.mxu0
    %v1237 = vadd.f32 %v1167, %v1236
    %v1238 = vpop.f32.mrf.mxu0
    %v1239 = vadd.f32 %v1168, %v1238
    %1240 = vmatmul.bf16.gmra.mxu0 %v1211
    %v1241 = vpop.f32.mrf.mxu0
    %v1242 = vadd.f32 %v1169, %v1241
    %v1243 = vpop.f32.mrf.mxu0
    %v1244 = vadd.f32 %v1170, %v1243
    %1245 = vmatmul.bf16.gmra.mxu0 %v1214
    %v1246 = vpop.f32.mrf.mxu0
    %v1247 = vadd.f32 %v1171, %v1246
    %v1248 = vpop.f32.mrf.mxu0
    %v1249 = vadd.f32 %v1172, %v1248
    %1250 = vdwg.mxu0
    %vm1251 = vcmask 261120
    %v1252 = vsel %vm1251, %v1232, -inf
    %1253 = vmax.xlane.f32.xlu0 %v1252
    %v1254 = vpop.xlane.xlu0 %1253
    %v1255 = vsel %vm1251, %v1234, -inf
    %1256 = vmax.xlane.f32.xlu0 %v1255
    %v1257 = vpop.xlane.xlu0 %1256
    %v1258 = vsel %vm1251, %v1237, -inf
    %1259 = vmax.xlane.f32.xlu0 %v1258
    %v1260 = vpop.xlane.xlu0 %1259
    %v1261 = vsel %vm1251, %v1239, -inf
    %1262 = vmax.xlane.f32.xlu0 %v1261
    %v1263 = vpop.xlane.xlu0 %1262
    %v1264 = vsel %vm1251, %v1242, -inf
    %1265 = vmax.xlane.f32.xlu0 %v1264
    %v1266 = vpop.xlane.xlu0 %1265
    %v1267 = vsel %vm1251, %v1244, -inf
    %1268 = vmax.xlane.f32.xlu0 %v1267
    %v1269 = vpop.xlane.xlu0 %1268
    %v1270 = vsel %vm1251, %v1247, -inf
    %1271 = vmax.xlane.f32.xlu0 %v1270
    %v1272 = vpop.xlane.xlu0 %1271
    %v1273 = vsel %vm1251, %v1249, -inf
    %1274 = vmax.xlane.f32.xlu0 %v1273
    %v1275 = vpop.xlane.xlu0 %1274
    %v1276 = vsub.f32 %v1232, %v1254
    %v1277 = vsub.f32 %v1234, %v1257
    %v1278 = vsub.f32 %v1237, %v1260
    %v1279 = vsub.f32 %v1239, %v1263
    %v1280 = vsub.f32 %v1242, %v1266
    %v1281 = vsub.f32 %v1244, %v1269
    %v1282 = vsub.f32 %v1247, %v1272
    %v1283 = vsub.f32 %v1249, %v1275
    %v1284 = vmul.f32 %v1276, 1.442695
    %v1285 = vpow.pop %v1284
    %v1286 = vmul.f32 %v1277, 1.442695
    %v1287 = vpow.pop %v1286
    %v1288 = vmul.f32 %v1278, 1.442695
    %v1289 = vpow.pop %v1288
    %v1290 = vmul.f32 %v1279, 1.442695
    %v1291 = vpow.pop %v1290
    %v1292 = vmul.f32 %v1280, 1.442695
    %v1293 = vpow.pop %v1292
    %v1294 = vmul.f32 %v1281, 1.442695
    %v1295 = vpow.pop %v1294
    %v1296 = vmul.f32 %v1282, 1.442695
    %v1297 = vpow.pop %v1296
    %v1298 = vmul.f32 %v1283, 1.442695
    %v1299 = vpow.pop %v1298
    %v1300 = vsel %vm1251, %v1285, 0.0
    %1301 = vadd.xlane.f32.xlu0 %v1300
    %v1302 = vpop.xlane.xlu0 %1301
    %v1303 = vsel %vm1251, %v1287, 0.0
    %1304 = vadd.xlane.f32.xlu0 %v1303
    %v1305 = vpop.xlane.xlu0 %1304
    %v1306 = vsel %vm1251, %v1289, 0.0
    %1307 = vadd.xlane.f32.xlu0 %v1306
    %v1308 = vpop.xlane.xlu0 %1307
    %v1309 = vsel %vm1251, %v1291, 0.0
    %1310 = vadd.xlane.f32.xlu0 %v1309
    %v1311 = vpop.xlane.xlu0 %1310
    %v1312 = vsel %vm1251, %v1293, 0.0
    %1313 = vadd.xlane.f32.xlu0 %v1312
    %v1314 = vpop.xlane.xlu0 %1313
    %v1315 = vsel %vm1251, %v1295, 0.0
    %1316 = vadd.xlane.f32.xlu0 %v1315
    %v1317 = vpop.xlane.xlu0 %1316
    %v1318 = vsel %vm1251, %v1297, 0.0
    %1319 = vadd.xlane.f32.xlu0 %v1318
    %v1320 = vpop.xlane.xlu0 %1319
    %v1321 = vsel %vm1251, %v1299, 0.0
    %1322 = vadd.xlane.f32.xlu0 %v1321
    %v1323 = vpop.xlane.xlu0 %1322
    %v1324 = vrcp.pop %v1302
    %v1325 = vrcp.pop %v1305
    %v1326 = vrcp.pop %v1308
    %v1327 = vrcp.pop %v1311
    %v1328 = vrcp.pop %v1314
    %v1329 = vrcp.pop %v1317
    %v1330 = vrcp.pop %v1320
    %v1331 = vrcp.pop %v1323
    %v1332 = vmul.f32 %v1285, %v1324
    %v1333 = vmul.f32 %v1287, %v1325
    %v1334 = vmul.f32 %v1289, %v1326
    %v1335 = vmul.f32 %v1291, %v1327
    %v1336 = vmul.f32 %v1293, %v1328
    %v1337 = vmul.f32 %v1295, %v1329
    %v1338 = vmul.f32 %v1297, %v1330
    %v1339 = vmul.f32 %v1299, %v1331
    %v1340 = vpack.c.bf16 %v1333, %v1332
    %v1341 = vpack.c.bf16 %v1335, %v1334
    %v1342 = vpack.c.bf16 %v1337, %v1336
    %v1343 = vpack.c.bf16 %v1339, %v1338
    %v1345 = vsel %vm1251, %v1340, 0
    %v1348 = vsel %vm1251, %v1341, 0
    %v1351 = vsel %vm1251, %v1342, 0
    %v1354 = vsel %vm1251, %v1343, 0
    %1356 = vmatpush.bf16.msra.mxu0 0
    %1357 = vmatpush.bf16.msra.mxu0 0
    %1358 = vmatpush.bf16.msra.mxu0 0
    %1359 = vmatpush.bf16.msra.mxu0 0
    %1360 = vmatpush.bf16.msra.mxu0 0
    %1361 = vmatpush.bf16.msra.mxu0 0
    %1362 = vmatpush.bf16.msra.mxu0 %v1164
    %1363 = vmatpush.bf16.msra.mxu0 %v1163
    %1364 = vmatmul.bf16.gmra.mxu0 %v1345
    %v1365 = vpop.f32.mrf.mxu0
    %v1366 = vadd.f32 0.0, %v1365
    %v1367 = vpop.f32.mrf.mxu0
    %v1368 = vadd.f32 0.0, %v1367
    %1369 = vmatmul.bf16.gmra.mxu0 %v1348
    %v1370 = vpop.f32.mrf.mxu0
    %v1371 = vadd.f32 0.0, %v1370
    %v1372 = vpop.f32.mrf.mxu0
    %v1373 = vadd.f32 0.0, %v1372
    %1374 = vmatmul.bf16.gmra.mxu0 %v1351
    %v1375 = vpop.f32.mrf.mxu0
    %v1376 = vadd.f32 0.0, %v1375
    %v1377 = vpop.f32.mrf.mxu0
    %v1378 = vadd.f32 0.0, %v1377
    %1379 = vmatmul.bf16.gmra.mxu0 %v1354
    %v1380 = vpop.f32.mrf.mxu0
    %v1381 = vadd.f32 0.0, %v1380
    %v1382 = vpop.f32.mrf.mxu0
    %v1383 = vadd.f32 0.0, %v1382
    %1384 = vdwg.mxu0
    %v1385 = vrot.slane %v1376, 4
    %v1386 = vsel %vm216, %v1385, %v1366
    %v1387 = vrot.slane %v1366, 4
    %v1388 = vsel %vm216, %v1376, %v1387
    %v1390 = vunpack.c.l.s4 1983009808
    %v1391 = vunpack.c.0.s8 %v1390
    %v1392 = vperm.slane %v1386, %v1391
    %v1394 = vunpack.c.l.s4 1983009808
    %v1395 = vunpack.c.0.s8 %v1394
    %v1396 = vperm.slane %v1388, %v1395
    %v1397 = vrot.slane %v1381, 4
    %v1398 = vsel %vm216, %v1397, %v1371
    %v1399 = vrot.slane %v1371, 4
    %v1400 = vsel %vm216, %v1381, %v1399
    %v1402 = vunpack.c.l.s4 1983009808
    %v1403 = vunpack.c.0.s8 %v1402
    %v1404 = vperm.slane %v1398, %v1403
    %v1406 = vunpack.c.l.s4 1983009808
    %v1407 = vunpack.c.0.s8 %v1406
    %v1408 = vperm.slane %v1400, %v1407
    %v1409 = vrot.slane %v1404, 4
    %v1410 = vsel %vm216, %v1409, %v1392
    %v1411 = vrot.slane %v1392, 4
    %v1412 = vsel %vm216, %v1404, %v1411
    %v1414 = vunpack.c.l.s4 1934713408
    %v1415 = vunpack.c.0.s8 %v1414
    %v1416 = vperm.slane %v1410, %v1415
    %v1418 = vunpack.c.l.s4 1934713408
    %v1419 = vunpack.c.0.s8 %v1418
    %v1420 = vperm.slane %v1412, %v1419
    %v1421 = vrot.slane %v1408, 4
    %v1422 = vsel %vm216, %v1421, %v1396
    %v1423 = vrot.slane %v1396, 4
    %v1424 = vsel %vm216, %v1408, %v1423
    %v1426 = vunpack.c.l.s4 1934713408
    %v1427 = vunpack.c.0.s8 %v1426
    %v1428 = vperm.slane %v1422, %v1427
    %v1430 = vunpack.c.l.s4 1934713408
    %v1431 = vunpack.c.0.s8 %v1430
    %v1432 = vperm.slane %v1424, %v1431
    %v1433 = vrot.slane %v1416, 4
    %v1434 = vsel %vm216, 0.0, %v1433
    %v1435 = vrot.slane %v1420, 4
    %v1436 = vsel %vm216, 0.0, %v1435
    %v1437 = vrot.slane %v1428, 4
    %v1438 = vsel %vm216, 0.0, %v1437
    %v1439 = vrot.slane %v1432, 4
    %v1440 = vsel %vm216, 0.0, %v1439
    %v1441 = vrot.slane %v1378, 4
    %v1442 = vsel %vm216, %v1441, %v1368
    %v1443 = vrot.slane %v1368, 4
    %v1444 = vsel %vm216, %v1378, %v1443
    %v1446 = vunpack.c.l.s4 1983009808
    %v1447 = vunpack.c.0.s8 %v1446
    %v1448 = vperm.slane %v1442, %v1447
    %v1450 = vunpack.c.l.s4 1983009808
    %v1451 = vunpack.c.0.s8 %v1450
    %v1452 = vperm.slane %v1444, %v1451
    %v1453 = vrot.slane %v1383, 4
    %v1454 = vsel %vm216, %v1453, %v1373
    %v1455 = vrot.slane %v1373, 4
    %v1456 = vsel %vm216, %v1383, %v1455
    %v1458 = vunpack.c.l.s4 1983009808
    %v1459 = vunpack.c.0.s8 %v1458
    %v1460 = vperm.slane %v1454, %v1459
    %v1462 = vunpack.c.l.s4 1983009808
    %v1463 = vunpack.c.0.s8 %v1462
    %v1464 = vperm.slane %v1456, %v1463
    %v1465 = vrot.slane %v1460, 4
    %v1466 = vsel %vm216, %v1465, %v1448
    %v1467 = vrot.slane %v1448, 4
    %v1468 = vsel %vm216, %v1460, %v1467
    %v1470 = vunpack.c.l.s4 1934713408
    %v1471 = vunpack.c.0.s8 %v1470
    %v1472 = vperm.slane %v1466, %v1471
    %v1474 = vunpack.c.l.s4 1934713408
    %v1475 = vunpack.c.0.s8 %v1474
    %v1476 = vperm.slane %v1468, %v1475
    %v1477 = vrot.slane %v1464, 4
    %v1478 = vsel %vm216, %v1477, %v1452
    %v1479 = vrot.slane %v1452, 4
    %v1480 = vsel %vm216, %v1464, %v1479
    %v1482 = vunpack.c.l.s4 1934713408
    %v1483 = vunpack.c.0.s8 %v1482
    %v1484 = vperm.slane %v1478, %v1483
    %v1486 = vunpack.c.l.s4 1934713408
    %v1487 = vunpack.c.0.s8 %v1486
    %v1488 = vperm.slane %v1480, %v1487
    %v1489 = vrot.slane %v1472, 4
    %v1490 = vsel %vm216, 0.0, %v1489
    %v1491 = vrot.slane %v1476, 4
    %v1492 = vsel %vm216, 0.0, %v1491
    %v1493 = vrot.slane %v1484, 4
    %v1494 = vsel %vm216, 0.0, %v1493
    %v1495 = vrot.slane %v1488, 4
    %v1496 = vsel %vm216, 0.0, %v1495
    %v1497 = vsel %vm216, %v1435, %v1416
    %v1499 = vunpack.c.l.s4 1983009808
    %v1500 = vunpack.c.0.s8 %v1499
    %v1501 = vperm.slane %v1497, %v1500
    %v1502 = vrot.slane %v1436, 4
    %v1503 = vsel %vm216, %v1502, %v1434
    %v1505 = vunpack.c.l.s4 1983009808
    %v1506 = vunpack.c.0.s8 %v1505
    %v1507 = vperm.slane %v1503, %v1506
    %v1508 = vsel %vm216, %v1439, %v1428
    %v1510 = vunpack.c.l.s4 1983009808
    %v1511 = vunpack.c.0.s8 %v1510
    %v1512 = vperm.slane %v1508, %v1511
    %v1513 = vrot.slane %v1440, 4
    %v1514 = vsel %vm216, %v1513, %v1438
    %v1516 = vunpack.c.l.s4 1983009808
    %v1517 = vunpack.c.0.s8 %v1516
    %v1518 = vperm.slane %v1514, %v1517
    %v1519 = vrot.slane %v1507, 4
    %v1520 = vsel %vm216, %v1519, %v1501
    %v1521 = vrot.slane %v1501, 4
    %v1522 = vsel %vm216, %v1507, %v1521
    %v1524 = vunpack.c.l.s4 1934713408
    %v1525 = vunpack.c.0.s8 %v1524
    %v1526 = vperm.slane %v1520, %v1525
    %v1528 = vunpack.c.l.s4 1934713408
    %v1529 = vunpack.c.0.s8 %v1528
    %v1530 = vperm.slane %v1522, %v1529
    %v1531 = vrot.slane %v1518, 4
    %v1532 = vsel %vm216, %v1531, %v1512
    %v1533 = vrot.slane %v1512, 4
    %v1534 = vsel %vm216, %v1518, %v1533
    %v1536 = vunpack.c.l.s4 1934713408
    %v1537 = vunpack.c.0.s8 %v1536
    %v1538 = vperm.slane %v1532, %v1537
    %v1540 = vunpack.c.l.s4 1934713408
    %v1541 = vunpack.c.0.s8 %v1540
    %v1542 = vperm.slane %v1534, %v1541
    %v1543 = vrot.slane %v1538, 4
    %v1544 = vsel %vm216, %v1543, %v1526
    %v1545 = vrot.slane %v1526, 4
    %v1546 = vsel %vm216, %v1538, %v1545
    %v1547 = vrot.slane %v1542, 4
    %v1548 = vsel %vm216, %v1547, %v1530
    %v1549 = vrot.slane %v1530, 4
    %v1550 = vsel %vm216, %v1542, %v1549
    %v1551 = vsel %vm216, %v1491, %v1472
    %v1553 = vunpack.c.l.s4 1983009808
    %v1554 = vunpack.c.0.s8 %v1553
    %v1555 = vperm.slane %v1551, %v1554
    %v1556 = vrot.slane %v1492, 4
    %v1557 = vsel %vm216, %v1556, %v1490
    %v1559 = vunpack.c.l.s4 1983009808
    %v1560 = vunpack.c.0.s8 %v1559
    %v1561 = vperm.slane %v1557, %v1560
    %v1562 = vsel %vm216, %v1495, %v1484
    %v1564 = vunpack.c.l.s4 1983009808
    %v1565 = vunpack.c.0.s8 %v1564
    %v1566 = vperm.slane %v1562, %v1565
    %v1567 = vrot.slane %v1496, 4
    %v1568 = vsel %vm216, %v1567, %v1494
    %v1570 = vunpack.c.l.s4 1983009808
    %v1571 = vunpack.c.0.s8 %v1570
    %v1572 = vperm.slane %v1568, %v1571
    %v1573 = vrot.slane %v1561, 4
    %v1574 = vsel %vm216, %v1573, %v1555
    %v1575 = vrot.slane %v1555, 4
    %v1576 = vsel %vm216, %v1561, %v1575
    %v1578 = vunpack.c.l.s4 1934713408
    %v1579 = vunpack.c.0.s8 %v1578
    %v1580 = vperm.slane %v1574, %v1579
    %v1582 = vunpack.c.l.s4 1934713408
    %v1583 = vunpack.c.0.s8 %v1582
    %v1584 = vperm.slane %v1576, %v1583
    %v1585 = vrot.slane %v1572, 4
    %v1586 = vsel %vm216, %v1585, %v1566
    %v1587 = vrot.slane %v1566, 4
    %v1588 = vsel %vm216, %v1572, %v1587
    %v1590 = vunpack.c.l.s4 1934713408
    %v1591 = vunpack.c.0.s8 %v1590
    %v1592 = vperm.slane %v1586, %v1591
    %v1594 = vunpack.c.l.s4 1934713408
    %v1595 = vunpack.c.0.s8 %v1594
    %v1596 = vperm.slane %v1588, %v1595
    %v1597 = vrot.slane %v1592, 4
    %v1598 = vsel %vm216, %v1597, %v1580
    %v1599 = vrot.slane %v1580, 4
    %v1600 = vsel %vm216, %v1592, %v1599
    %v1601 = vrot.slane %v1596, 4
    %v1602 = vsel %vm216, %v1601, %v1584
    %v1603 = vrot.slane %v1584, 4
    %v1604 = vsel %vm216, %v1596, %v1603
    %1607 = vrot.lane.b32.xlu0 %v1546, 16
    %v1608 = vpop.permute.xlu0 %1607
    %1609 = vrot.lane.b32.xlu0 %v1600, 16
    %v1610 = vpop.permute.xlu0 %1609
    %1615 = vrot.lane.b32.xlu0 %v1548, 32
    %v1616 = vpop.permute.xlu0 %1615
    %1617 = vrot.lane.b32.xlu0 %v1602, 32
    %v1618 = vpop.permute.xlu0 %1617
    %1623 = vrot.lane.b32.xlu0 %v1550, 48
    %v1624 = vpop.permute.xlu0 %1623
    %1625 = vrot.lane.b32.xlu0 %v1604, 48
    %v1626 = vpop.permute.xlu0 %1625
    %v1629 = vsel %vm1203, %v1544, %v1608
    %v1630 = vsel %vm1203, %v1598, %v1610
    %v1631 = vsel %vm1251, %v1629, %v1616
    %v1632 = vsel %vm1251, %v1630, %v1618
    %vm1633 = vcmask 392192
    %v1634 = vsel %vm1633, %v1631, %v1624
    %v1635 = vsel %vm1633, %v1632, %v1626
    %v1636 = vpack.c.bf16 %v1635, %v1634
    %v1637 = vld [vmem:[#allocation2] sm:$0xf]
    %v1638 = vld [vmem:[#allocation2 + $0x4] sm:$0xf]
    %v1639 = vld [vmem:[#allocation2 + $0x8] sm:$0xf]
    %v1640 = vld [vmem:[#allocation2 + $0xc] sm:$0xf]
    %v1641 = vld [vmem:[#allocation2 + $0x10] sm:$0xf]
    %v1642 = vld [vmem:[#allocation2 + $0x14] sm:$0xf]
    %v1643 = vld [vmem:[#allocation2 + $0x18] sm:$0xf]
    %v1644 = vld [vmem:[#allocation2 + $0x1c] sm:$0xf]
    %v1653 = vunpack.c.l.b16 %v1637
    %v1654 = vunpack.c.l.b16 %v1638
    %v1655 = vunpack.c.l.b16 %v1639
    %v1656 = vunpack.c.l.b16 %v1640
    %v1657 = vunpack.c.l.b16 %v1641
    %v1658 = vunpack.c.l.b16 %v1642
    %v1659 = vunpack.c.l.b16 %v1643
    %v1660 = vunpack.c.l.b16 %v1644
    %v1661 = vpack.c.b16 %v1654, %v1653
    %v1662 = vpack.c.b16 %v1656, %v1655
    %v1663 = vpack.c.b16 %v1658, %v1657
    %v1664 = vpack.c.b16 %v1660, %v1659
    %v1670 = vsel %vm49, %v1636, 0
    %1672 = vmatpush.bf16.msra.mxu0 0
    %1673 = vmatpush.bf16.msra.mxu0 0
    %1674 = vmatpush.bf16.msra.mxu0 0
    %1675 = vmatpush.bf16.msra.mxu0 0
    %1676 = vmatpush.bf16.msra.mxu0 %v1664
    %1677 = vmatpush.bf16.msra.mxu0 %v1663
    %1678 = vmatpush.bf16.msra.mxu0 %v1662
    %1679 = vmatpush.bf16.msra.mxu0 %v1661
    %1680 = vmatmul.bf16.gmra.mxu0 %v1670
    %v1681 = vpop.f32.mrf.mxu0
    %v1682 = vadd.f32 0.0, %v1681
    %v1683 = vpop.f32.mrf.mxu0
    %v1684 = vadd.f32 0.0, %v1683
    %1685 = vdwg.mxu0
    %v1686 = vadd.f32 %v41, %v1682
    %v1687 = vadd.f32 %v42, %v1684
    %v1688 = vmul.f32 %v1686, %v1686
    %v1689 = vmul.f32 %v1687, %v1687
    %v1690 = vsel %vm49, %v1688, 0.0
    %1691 = vadd.xlane.f32.xlu0 %v1690
    %v1692 = vpop.xlane.xlu0 %1691
    %v1693 = vsel %vm49, %v1689, 0.0
    %1694 = vadd.xlane.f32.xlu0 %v1693
    %v1695 = vpop.xlane.xlu0 %1694
    %v1696 = vmul.f32 %v1692, %v62
    %v1697 = vmul.f32 %v1695, %v62
    %v1698 = vadd.f32 %v1696, 1e-05
    %v1699 = vadd.f32 %v1697, 1e-05
    %v1700 = vrsqrt.pop %v1698
    %v1701 = vmul.f32 %v1700, %v1698
    %v1702 = vmul.f32 %v1701, %v1700
    %v1703 = vmul.f32 0.5, %v1702
    %v1704 = vsub.f32 1.5, %v1703
    %v1705 = vmul.f32 %v1700, %v1704
    %vm1706 = vweird.f32 %v1698
    %vm1707 = vweird.f32 %v1700
    %vm1708 = vmor %vm1706, %vm1707
    %v1709 = vsel %vm1708, %v1700, %v1705
    %v1710 = vrsqrt.pop %v1699
    %v1711 = vmul.f32 %v1710, %v1699
    %v1712 = vmul.f32 %v1711, %v1710
    %v1713 = vmul.f32 0.5, %v1712
    %v1714 = vsub.f32 1.5, %v1713
    %v1715 = vmul.f32 %v1710, %v1714
    %vm1716 = vweird.f32 %v1699
    %vm1717 = vweird.f32 %v1710
    %vm1718 = vmor %vm1716, %vm1717
    %v1719 = vsel %vm1718, %v1710, %v1715
    %v1720 = vmul.f32 %v1686, %v1709
    %v1721 = vmul.f32 %v1687, %v1719
    %v1722 = vpack.c.bf16 %v1721, %v1720
    %v1723 = vld [vmem:[%s4] sm:$0xff]
    %v1724 = vld [vmem:[%s4 + $0x8] sm:$0xff]
    %v1725 = vld [vmem:[%s4 + $0x10] sm:$0xff]
    %v1726 = vld [vmem:[%s4 + $0x18] sm:$0xff]
    %v1727 = vld [vmem:[%s4 + $0x20] sm:$0xff]
    %v1728 = vld [vmem:[%s4 + $0x28] sm:$0xff]
    %v1729 = vld [vmem:[%s4 + $0x30] sm:$0xff]
    %v1730 = vld [vmem:[%s4 + $0x38] sm:$0xff]
    %v1739 = vunpack.c.l.b16 %v1723
    %v1740 = vunpack.c.h.b16 %v1723
    %v1741 = vunpack.c.l.b16 %v1724
    %v1742 = vunpack.c.h.b16 %v1724
    %v1743 = vunpack.c.l.b16 %v1725
    %v1744 = vunpack.c.h.b16 %v1725
    %v1745 = vunpack.c.l.b16 %v1726
    %v1746 = vunpack.c.h.b16 %v1726
    %v1747 = vunpack.c.l.b16 %v1727
    %v1748 = vunpack.c.h.b16 %v1727
    %v1749 = vunpack.c.l.b16 %v1728
    %v1750 = vunpack.c.h.b16 %v1728
    %v1751 = vunpack.c.l.b16 %v1729
    %v1752 = vunpack.c.h.b16 %v1729
    %v1753 = vunpack.c.l.b16 %v1730
    %v1754 = vunpack.c.h.b16 %v1730
    %v1755 = vpack.c.b16 %v1741, %v1739
    %v1756 = vpack.c.b16 %v1742, %v1740
    %v1757 = vpack.c.b16 %v1745, %v1743
    %v1758 = vpack.c.b16 %v1746, %v1744
    %v1759 = vpack.c.b16 %v1749, %v1747
    %v1760 = vpack.c.b16 %v1750, %v1748
    %v1761 = vpack.c.b16 %v1753, %v1751
    %v1762 = vpack.c.b16 %v1754, %v1752
    %v1772 = vsel %vm49, %v1722, 0
    %1774 = vmatpush.bf16.msra.mxu0 0
    %1775 = vmatpush.bf16.msra.mxu0 0
    %1776 = vmatpush.bf16.msra.mxu0 0
    %1777 = vmatpush.bf16.msra.mxu0 0
    %1778 = vmatpush.bf16.msra.mxu0 %v1761
    %1779 = vmatpush.bf16.msra.mxu0 %v1759
    %1780 = vmatpush.bf16.msra.mxu0 %v1757
    %1781 = vmatpush.bf16.msra.mxu0 %v1755
    %1782 = vmatmul.bf16.gmra.mxu0 %v1772
    %v1783 = vpop.f32.mrf.mxu0
    %v1784 = vadd.f32 0.0, %v1783
    %v1785 = vpop.f32.mrf.mxu0
    %v1786 = vadd.f32 0.0, %v1785
    %1787 = vdwg.mxu0
    %1788 = vmatpush.bf16.msra.mxu0 0
    %1789 = vmatpush.bf16.msra.mxu0 0
    %1790 = vmatpush.bf16.msra.mxu0 0
    %1791 = vmatpush.bf16.msra.mxu0 0
    %1792 = vmatpush.bf16.msra.mxu0 %v1762
    %1793 = vmatpush.bf16.msra.mxu0 %v1760
    %1794 = vmatpush.bf16.msra.mxu0 %v1758
    %1795 = vmatpush.bf16.msra.mxu0 %v1756
    %1796 = vmatmul.bf16.gmra.mxu0 %v1772
    %v1797 = vpop.f32.mrf.mxu0
    %v1798 = vadd.f32 0.0, %v1797
    %v1799 = vpop.f32.mrf.mxu0
    %v1800 = vadd.f32 0.0, %v1799
    %1801 = vdwg.mxu0
    %v1802 = vsub.f32 0.0, %v1784
    %v1803 = vsub.f32 0.0, %v1786
    %v1804 = vmul.f32 %v1802, 1.442695
    %v1805 = vpow.pop %v1804
    %v1806 = vmul.f32 %v1803, 1.442695
    %v1807 = vpow.pop %v1806
    %v1808 = vadd.f32 %v1805, 1.0
    %v1809 = vadd.f32 %v1807, 1.0
    %v1810 = vrcp.pop %v1808
    %v1811 = vrcp.pop %v1809
    %v1812 = vmul.f32 %v1784, %v1810
    %v1813 = vmul.f32 %v1786, %v1811
    %v1814 = vmul.f32 %v1812, %v1798
    %v1815 = vmul.f32 %v1813, %v1800
    %v1816 = vpack.c.bf16 %v1815, %v1814
    %v1817 = vld [vmem:[%s5] sm:$0xf]
    %v1818 = vld [vmem:[%s5 + $0x4] sm:$0xf]
    %v1819 = vld [vmem:[%s5 + $0x8] sm:$0xf]
    %v1820 = vld [vmem:[%s5 + $0xc] sm:$0xf]
    %v1821 = vld [vmem:[%s5 + $0x10] sm:$0xf]
    %v1822 = vld [vmem:[%s5 + $0x14] sm:$0xf]
    %v1823 = vld [vmem:[%s5 + $0x18] sm:$0xf]
    %v1824 = vld [vmem:[%s5 + $0x1c] sm:$0xf]
    %v1825 = vld [vmem:[%s5 + $0x20] sm:$0xf]
    %v1826 = vld [vmem:[%s5 + $0x24] sm:$0xf]
    %v1827 = vld [vmem:[%s5 + $0x28] sm:$0xf]
    %v1828 = vld [vmem:[%s5 + $0x2c] sm:$0xf]
    %v1829 = vld [vmem:[%s5 + $0x30] sm:$0xf]
    %v1830 = vld [vmem:[%s5 + $0x34] sm:$0xf]
    %v1831 = vld [vmem:[%s5 + $0x38] sm:$0xf]
    %v1832 = vld [vmem:[%s5 + $0x3c] sm:$0xf]
    %v1849 = vunpack.c.l.b16 %v1817
    %v1850 = vunpack.c.l.b16 %v1818
    %v1851 = vunpack.c.l.b16 %v1819
    %v1852 = vunpack.c.l.b16 %v1820
    %v1853 = vunpack.c.l.b16 %v1821
    %v1854 = vunpack.c.l.b16 %v1822
    %v1855 = vunpack.c.l.b16 %v1823
    %v1856 = vunpack.c.l.b16 %v1824
    %v1857 = vunpack.c.l.b16 %v1825
    %v1858 = vunpack.c.l.b16 %v1826
    %v1859 = vunpack.c.l.b16 %v1827
    %v1860 = vunpack.c.l.b16 %v1828
    %v1861 = vunpack.c.l.b16 %v1829
    %v1862 = vunpack.c.l.b16 %v1830
    %v1863 = vunpack.c.l.b16 %v1831
    %v1864 = vunpack.c.l.b16 %v1832
    %v1865 = vpack.c.b16 %v1850, %v1849
    %v1866 = vpack.c.b16 %v1852, %v1851
    %v1867 = vpack.c.b16 %v1854, %v1853
    %v1868 = vpack.c.b16 %v1856, %v1855
    %v1869 = vpack.c.b16 %v1858, %v1857
    %v1870 = vpack.c.b16 %v1860, %v1859
    %v1871 = vpack.c.b16 %v1862, %v1861
    %v1872 = vpack.c.b16 %v1864, %v1863
    %1881 = vmatpush.bf16.msra.mxu0 %v1872
    %1882 = vmatpush.bf16.msra.mxu0 %v1871
    %1883 = vmatpush.bf16.msra.mxu0 %v1870
    %1884 = vmatpush.bf16.msra.mxu0 %v1869
    %1885 = vmatpush.bf16.msra.mxu0 %v1868
    %1886 = vmatpush.bf16.msra.mxu0 %v1867
    %1887 = vmatpush.bf16.msra.mxu0 %v1866
    %1888 = vmatpush.bf16.msra.mxu0 %v1865
    %1889 = vmatmul.bf16.gmra.mxu0 %v1816
    %v1890 = vpop.f32.mrf.mxu0
    %v1891 = vadd.f32 0.0, %v1890
    %v1892 = vpop.f32.mrf.mxu0
    %v1893 = vadd.f32 0.0, %v1892
    %1894 = vdwg.mxu0
    %v1895 = vadd.f32 %v1686, %v1891
    %v1896 = vadd.f32 %v1687, %v1893
    %1897 = vst.msk [vmem:[#allocation5] sm:$0xff] %vm49, %v1895
    %1898 = vst.msk [vmem:[#allocation5 + $0x8] sm:$0xff] %vm49, %v1896
    // Predicated region
    $region30: #{tpu_custom_call.1} parent=1 // pred_check
      _
    $region31: #{tpu_custom_call.1} parent=1 // pred_check_branch
      %1900 = sbr.rel (0) target = $region33
    $region32: #{tpu_custom_call.1} parent=1 // pred_region
      %1902 = vsyncadd [#allocation4], 0
      %s1903 = sshll.u32 [#allocation5], 4
      %s1904 = int_to_ptr.vmem [resolvable:$true] %s1903
      %s1905 = sshll.u32 %s6, 4
      %s1906 = int_to_ptr.hbm [resolvable:$true] %s1905
      %1911 = dma.vmem_to_hbm [thread:$0]  %s1904, 256, %s1906, [#allocation4], 128, 128, 8
    $region33: #{tpu_custom_call.1} parent=1 // pred_fallthru
      _
    // Predicated region
    $region34: #{tpu_custom_call.1} parent=1 // pred_check
      _
    $region35: #{tpu_custom_call.1} parent=1 // pred_check_branch
      %1913 = sbr.rel (0) target = $region37
    $region36: #{tpu_custom_call.1} parent=1 // pred_region
      %1915 = dma.done [#allocation4], 256
    $region37: #{tpu_custom_call.1} parent=1 // pred_fallthru
      _
    %1916 = vsyncpa [#allocation3], 1
    %1917 = vsyncpa [#allocation4], 1

</llo_original>
